<compile_context>
chip_gen: v7x
topology: tpu7x:2x2x1
jax: 0.10.0
libtpu: 0.0.40
codegen_flags: <defaults>
</compile_context>

<pallas_src>
import jax
import jax.numpy as jnp
from jax.experimental import pallas as pl
from jax.experimental.pallas import tpu as pltpu


# -----------------------------------------------------------------------------
# Fused kernel: in-VMEM im2col + single conv matmul + bias + ReLU
#               + global-avg-pool + linear head, one batch element per step.
# -----------------------------------------------------------------------------
def fused_conv_pool_fc_kernel(x_ref, cw_ref, cb_ref, fw_ref, fb_ref, o_ref,
                              patch_ref):
    """Refs:
      x_ref    : [1, H+2, W+2, C]  bf16  halo-padded NHWC image slab
      cw_ref   : [9*C, C_mid]      bf16  im2col conv weight, (dh, dw, c) major->minor
      cb_ref   : [1, C_mid]        f32   conv bias
      fw_ref   : [C_mid, NCp]      f32   FC weight (zero-padded to 128 lanes)
      fb_ref   : [1, NCp]          f32   FC bias   (zero-padded)
      o_ref    : [1, 1, NCp]       f32   logits for this batch element
      patch_ref: [H*W, 9*C]        bf16  VMEM scratch (in-VMEM im2col)
    """
    xt = x_ref[0]                                   # [H+2, W+2, C] (bf16)
    hp, wp, c = xt.shape
    h, w = hp - 2, wp - 2
    hw = h * w

    # Build the im2col patch matrix in VMEM from the already-resident slab
    # (statically unrolled taps, static slices -> cheap masked stores).
    for dh in range(3):
        for dw in range(3):
            t = dh * 3 + dw
            patch_ref[:, t * c:(t + 1) * c] = (
                xt[dh:dh + h, dw:dw + w, :].reshape(hw, c))

    # One MXU matmul for the whole 3x3 conv (K = 9*C), f32 accumulation.
    acc = jnp.dot(patch_ref[...], cw_ref[...],
                  preferred_element_type=jnp.float32)             # [HW, C_mid]

    relu = jnp.maximum(acc + cb_ref[...], 0.0)                    # [HW, C_mid]
    pooled = jnp.sum(relu, axis=0, keepdims=True) * (1.0 / hw)    # [1, C_mid]
    logits = jnp.dot(pooled, fw_ref[...],
                     preferred_element_type=jnp.float32) + fb_ref[...]
    o_ref[0] = logits.astype(o_ref.dtype)


# -----------------------------------------------------------------------------
# Wrapper: NCHW -> fused kernel -> [B, num_classes]
# -----------------------------------------------------------------------------
def net_forward(x_nchw, params):
    B, C, H, W = x_nchw.shape
    conv_w = params["conv_w"]                 # [C_mid, C, 3, 3]
    conv_b = params["conv_b"]                 # [C_mid]
    fc_w = params["fc_w"]                     # [C_mid, NC]
    fc_b = params["fc_b"]                     # [NC]
    C_mid = conv_w.shape[0]
    NC = fc_w.shape[1]
    NCp = ((NC + 127) // 128) * 128           # lane-dense head width

    # Halo-padded NHWC slab in bf16 (halves input DMA bytes; MXU-native).
    x_nhwc = jnp.transpose(x_nchw, (0, 2, 3, 1))
    x_pad = jnp.pad(x_nhwc, ((0, 0), (1, 1), (1, 1), (0, 0))).astype(jnp.bfloat16)

    # Conv weight in im2col layout [9*C, C_mid], (dh, dw, c) major -> minor:
    # w_im2col[(dh*3+dw)*C + c, o] == conv_w[o, c, dh, dw].
    w_im2col = jnp.transpose(conv_w, (2, 3, 1, 0)).reshape(9 * C, C_mid)
    w_im2col = w_im2col.astype(jnp.bfloat16)
    cb = conv_b.reshape(1, C_mid).astype(jnp.float32)

    # Zero-pad the tiny FC head so the only HBM output is a 128-lane-dense row.
    fw = jnp.zeros((C_mid, NCp), jnp.float32).at[:, :NC].set(fc_w)
    fb = jnp.zeros((1, NCp), jnp.float32).at[:, :NC].set(fc_b)

    # One image slab (double-buffered) + im2col scratch must fit VMEM; fine up
    # to large images even on v7x (64 MiB VMEM, 32 MiB scoped default).
    slab_bytes = (H + 2) * (W + 2) * C * 2
    patch_bytes = H * W * ((9 * C + 127) // 128) * 128 * 2
    assert 2 * slab_bytes + patch_bytes < 24 * 1024 * 1024, (
        "TODO(synk): row-tile with halo rows for very large spatial sizes")

    out = pl.pallas_call(
        fused_conv_pool_fc_kernel,
        out_shape=jax.ShapeDtypeStruct((B, 1, NCp), jnp.float32),
        grid_spec=pltpu.PrefetchScalarGridSpec(
            num_scalar_prefetch=0,
            grid=(B,),
            in_specs=[
                pl.BlockSpec((1, H + 2, W + 2, C), lambda b: (b, 0, 0, 0)),
                pl.BlockSpec((9 * C, C_mid), lambda b: (0, 0)),
                pl.BlockSpec((1, C_mid), lambda b: (0, 0)),
                pl.BlockSpec((C_mid, NCp), lambda b: (0, 0)),
                pl.BlockSpec((1, NCp), lambda b: (0, 0)),
            ],
            out_specs=pl.BlockSpec((1, 1, NCp), lambda b: (b, 0, 0)),
            scratch_shapes=[pltpu.VMEM((H * W, 9 * C), jnp.bfloat16)],
        ),
        compiler_params=pltpu.CompilerParams(
            dimension_semantics=("parallel",)),
    )(x_pad, w_im2col, cb, fw, fb)

    return out[:, 0, :NC]


def init_params(key, c_in=4, c_mid=32, num_classes=10):
    k1, k2, k3, k4 = jax.random.split(key, 4)
    return {
        "conv_w": jax.random.normal(k1, (c_mid, c_in, 3, 3), jnp.float32) * 0.1,
        "conv_b": jax.random.normal(k2, (c_mid,), jnp.float32) * 0.1,
        "fc_w": jax.random.normal(k3, (c_mid, num_classes), jnp.float32) * 0.1,
        "fc_b": jax.random.normal(k4, (num_classes,), jnp.float32) * 0.1,
    }


if __name__ == "__main__":
    key = jax.random.PRNGKey(0)
    kx, kp = jax.random.split(key)

    B, C, H, W = 2, 4, 16, 16
    C_mid, num_classes = 32, 10
    x = jax.random.normal(kx, (B, C, H, W), jnp.float32)
    params = init_params(kp, c_in=C, c_mid=C_mid, num_classes=num_classes)

    logits = net_forward(x, params)
    jax.block_until_ready(logits)

    # Reference: plain JAX f32 conv/pool/fc on the same bf16-rounded conv inputs.
    hi = jax.lax.Precision.HIGHEST
    xr = jnp.transpose(x, (0, 2, 3, 1)).astype(jnp.bfloat16).astype(jnp.float32)
    xr = jnp.pad(xr, ((0, 0), (1, 1), (1, 1), (0, 0)))
    wr = params["conv_w"].astype(jnp.bfloat16).astype(jnp.float32)  # [C_mid,C,3,3]
    conv = jnp.zeros((B, H, W, C_mid), jnp.float32)
    for dh in range(3):
        for dw in range(3):
            conv = conv + jnp.einsum(
                "bhwc,oc->bhwo",
                xr[:, dh:dh + H, dw:dw + W, :], wr[:, :, dh, dw], precision=hi)
    relu = jnp.maximum(conv + params["conv_b"][None, None, None, :], 0.0)
    pooled = relu.mean(axis=(1, 2))
    ref_logits = jnp.dot(pooled, params["fc_w"], precision=hi) + params["fc_b"][None, :]

    assert logits.shape == (B, num_classes)
    assert jnp.allclose(logits, ref_logits, atol=5e-3, rtol=5e-3)
    print("KERNEL_OK")
</pallas_src>

<mosaic_0001>
module attributes {stable_mosaic.version = 11 : i64} {
  func.func @fused_conv_pool_fc_kernel(%arg0: i32, %arg1: memref<1x18x18x4xbf16, #tpu.memory_space<vmem>>, %arg2: memref<36x32xbf16, #tpu.memory_space<vmem>>, %arg3: memref<1x32xf32, #tpu.memory_space<vmem>>, %arg4: memref<32x128xf32, #tpu.memory_space<vmem>>, %arg5: memref<1x128xf32, #tpu.memory_space<vmem>>, %arg6: memref<1x1x128xf32, #tpu.memory_space<vmem>>, %arg7: memref<256x36xbf16, #tpu.memory_space<vmem>>) attributes {dimension_semantics = [#tpu.dimension_semantics<parallel>], iteration_bounds = array<i64: 2>, scalar_prefetch = 0 : i64, scratch_operands = 1 : i64, tpu.core_type = #tpu.core_type<tc>, window_params = [{transform_indices = @transform_0, window_bounds = array<i64: 1, 18, 18, 4>}, {pipeline_mode = #tpu.pipeline_mode<synchronous>, transform_indices = @transform_1, window_bounds = array<i64: 36, 32>}, {pipeline_mode = #tpu.pipeline_mode<synchronous>, transform_indices = @transform_2, window_bounds = array<i64: 1, 32>}, {pipeline_mode = #tpu.pipeline_mode<synchronous>, transform_indices = @transform_3, window_bounds = array<i64: 32, 128>}, {pipeline_mode = #tpu.pipeline_mode<synchronous>, transform_indices = @transform_4, window_bounds = array<i64: 1, 128>}, {transform_indices = @transform_5, window_bounds = array<i64: 1, 1, 128>}]} {
    %c0 = arith.constant 0 : index
    %c0_0 = arith.constant 0 : index
    %c0_1 = arith.constant 0 : index
    %c0_2 = arith.constant 0 : index
    %0 = vector.load %arg1[%c0, %c0_0, %c0_1, %c0_2] : memref<1x18x18x4xbf16, #tpu.memory_space<vmem>>, vector<1x18x18x4xbf16>
    %1 = vector.shape_cast %0 : vector<1x18x18x4xbf16> to vector<18x18x4xbf16>
    %2 = vector.extract_strided_slice %1 {offsets = [0, 0, 0], sizes = [16, 16, 4], strides = [1, 1, 1]} : vector<18x18x4xbf16> to vector<16x16x4xbf16>
    %3 = vector.shape_cast %2 : vector<16x16x4xbf16> to vector<256x4xbf16>
    %c0_3 = arith.constant 0 : index
    %c0_4 = arith.constant 0 : index
    %4 = vector.load %arg7[%c0_3, %c0_4] : memref<256x36xbf16, #tpu.memory_space<vmem>>, vector<256x4xbf16>
    tpu.vector_store %arg7[%c0_3, %c0_4], %3 {strides = array<i32>} : memref<256x36xbf16, #tpu.memory_space<vmem>>, vector<256x4xbf16>,
    %5 = vector.extract_strided_slice %1 {offsets = [0, 1, 0], sizes = [16, 16, 4], strides = [1, 1, 1]} : vector<18x18x4xbf16> to vector<16x16x4xbf16>
    %6 = vector.shape_cast %5 : vector<16x16x4xbf16> to vector<256x4xbf16>
    %c0_5 = arith.constant 0 : index
    %c4 = arith.constant 4 : index
    %7 = vector.load %arg7[%c0_5, %c4] : memref<256x36xbf16, #tpu.memory_space<vmem>>, vector<256x4xbf16>
    tpu.vector_store %arg7[%c0_5, %c4], %6 {strides = array<i32>} : memref<256x36xbf16, #tpu.memory_space<vmem>>, vector<256x4xbf16>,
    %8 = vector.extract_strided_slice %1 {offsets = [0, 2, 0], sizes = [16, 16, 4], strides = [1, 1, 1]} : vector<18x18x4xbf16> to vector<16x16x4xbf16>
    %9 = vector.shape_cast %8 : vector<16x16x4xbf16> to vector<256x4xbf16>
    %c0_6 = arith.constant 0 : index
    %c8 = arith.constant 8 : index
    %10 = vector.load %arg7[%c0_6, %c8] : memref<256x36xbf16, #tpu.memory_space<vmem>>, vector<256x4xbf16>
    tpu.vector_store %arg7[%c0_6, %c8], %9 {strides = array<i32>} : memref<256x36xbf16, #tpu.memory_space<vmem>>, vector<256x4xbf16>,
    %11 = vector.extract_strided_slice %1 {offsets = [1, 0, 0], sizes = [16, 16, 4], strides = [1, 1, 1]} : vector<18x18x4xbf16> to vector<16x16x4xbf16>
    %12 = vector.shape_cast %11 : vector<16x16x4xbf16> to vector<256x4xbf16>
    %c0_7 = arith.constant 0 : index
    %c12 = arith.constant 12 : index
    %13 = vector.load %arg7[%c0_7, %c12] : memref<256x36xbf16, #tpu.memory_space<vmem>>, vector<256x4xbf16>
    tpu.vector_store %arg7[%c0_7, %c12], %12 {strides = array<i32>} : memref<256x36xbf16, #tpu.memory_space<vmem>>, vector<256x4xbf16>,
    %14 = vector.extract_strided_slice %1 {offsets = [1, 1, 0], sizes = [16, 16, 4], strides = [1, 1, 1]} : vector<18x18x4xbf16> to vector<16x16x4xbf16>
    %15 = vector.shape_cast %14 : vector<16x16x4xbf16> to vector<256x4xbf16>
    %c0_8 = arith.constant 0 : index
    %c16 = arith.constant 16 : index
    %16 = vector.load %arg7[%c0_8, %c16] : memref<256x36xbf16, #tpu.memory_space<vmem>>, vector<256x4xbf16>
    tpu.vector_store %arg7[%c0_8, %c16], %15 {strides = array<i32>} : memref<256x36xbf16, #tpu.memory_space<vmem>>, vector<256x4xbf16>,
    %17 = vector.extract_strided_slice %1 {offsets = [1, 2, 0], sizes = [16, 16, 4], strides = [1, 1, 1]} : vector<18x18x4xbf16> to vector<16x16x4xbf16>
    %18 = vector.shape_cast %17 : vector<16x16x4xbf16> to vector<256x4xbf16>
    %c0_9 = arith.constant 0 : index
    %c20 = arith.constant 20 : index
    %19 = vector.load %arg7[%c0_9, %c20] : memref<256x36xbf16, #tpu.memory_space<vmem>>, vector<256x4xbf16>
    tpu.vector_store %arg7[%c0_9, %c20], %18 {strides = array<i32>} : memref<256x36xbf16, #tpu.memory_space<vmem>>, vector<256x4xbf16>,
    %20 = vector.extract_strided_slice %1 {offsets = [2, 0, 0], sizes = [16, 16, 4], strides = [1, 1, 1]} : vector<18x18x4xbf16> to vector<16x16x4xbf16>
    %21 = vector.shape_cast %20 : vector<16x16x4xbf16> to vector<256x4xbf16>
    %c0_10 = arith.constant 0 : index
    %c24 = arith.constant 24 : index
    %22 = vector.load %arg7[%c0_10, %c24] : memref<256x36xbf16, #tpu.memory_space<vmem>>, vector<256x4xbf16>
    tpu.vector_store %arg7[%c0_10, %c24], %21 {strides = array<i32>} : memref<256x36xbf16, #tpu.memory_space<vmem>>, vector<256x4xbf16>,
    %23 = vector.extract_strided_slice %1 {offsets = [2, 1, 0], sizes = [16, 16, 4], strides = [1, 1, 1]} : vector<18x18x4xbf16> to vector<16x16x4xbf16>
    %24 = vector.shape_cast %23 : vector<16x16x4xbf16> to vector<256x4xbf16>
    %c0_11 = arith.constant 0 : index
    %c28 = arith.constant 28 : index
    %25 = vector.load %arg7[%c0_11, %c28] : memref<256x36xbf16, #tpu.memory_space<vmem>>, vector<256x4xbf16>
    tpu.vector_store %arg7[%c0_11, %c28], %24 {strides = array<i32>} : memref<256x36xbf16, #tpu.memory_space<vmem>>, vector<256x4xbf16>,
    %26 = vector.extract_strided_slice %1 {offsets = [2, 2, 0], sizes = [16, 16, 4], strides = [1, 1, 1]} : vector<18x18x4xbf16> to vector<16x16x4xbf16>
    %27 = vector.shape_cast %26 : vector<16x16x4xbf16> to vector<256x4xbf16>
    %c0_12 = arith.constant 0 : index
    %c32 = arith.constant 32 : index
    %28 = vector.load %arg7[%c0_12, %c32] : memref<256x36xbf16, #tpu.memory_space<vmem>>, vector<256x4xbf16>
    tpu.vector_store %arg7[%c0_12, %c32], %27 {strides = array<i32>} : memref<256x36xbf16, #tpu.memory_space<vmem>>, vector<256x4xbf16>,
    %c0_13 = arith.constant 0 : index
    %c0_14 = arith.constant 0 : index
    %29 = vector.load %arg7[%c0_13, %c0_14] : memref<256x36xbf16, #tpu.memory_space<vmem>>, vector<256x36xbf16>
    %c0_15 = arith.constant 0 : index
    %c0_16 = arith.constant 0 : index
    %30 = vector.load %arg2[%c0_15, %c0_16] : memref<36x32xbf16, #tpu.memory_space<vmem>>, vector<36x32xbf16>
    %cst = arith.constant dense<0.000000e+00> : vector<256x32xf32>
    %31 = tpu.matmul %29, %30, %cst {dimension_numbers = #tpu.dot_dimension_numbers<[1], [0], [0], [1], [0, 0, 1, 1], [], []>} : vector<256x36xbf16>, vector<36x32xbf16>, vector<256x32xf32> -> vector<256x32xf32>
    %c0_17 = arith.constant 0 : index
    %c0_18 = arith.constant 0 : index
    %32 = vector.load %arg3[%c0_17, %c0_18] : memref<1x32xf32, #tpu.memory_space<vmem>>, vector<1x32xf32>
    %33 = vector.broadcast %32 : vector<1x32xf32> to vector<256x32xf32>
    %34 = arith.addf %31, %33 : vector<256x32xf32>
    %cst_19 = arith.constant 0.000000e+00 : f32
    %35 = vector.broadcast %cst_19 : f32 to vector<256x32xf32>
    %36 = arith.maximumf %34, %35 : vector<256x32xf32>
    %cst_20 = arith.constant dense<0.000000e+00> : vector<32xf32>
    %37 = vector.multi_reduction <add>, %36, %cst_20 [0] : vector<256x32xf32> to vector<32xf32>
    %38 = vector.shape_cast %37 : vector<32xf32> to vector<1x32xf32>
    %cst_21 = arith.constant 3.906250e-03 : f32
    %39 = vector.broadcast %cst_21 : f32 to vector<1x32xf32>
    %40 = arith.mulf %38, %39 : vector<1x32xf32>
    %c0_22 = arith.constant 0 : index
    %c0_23 = arith.constant 0 : index
    %41 = vector.load %arg4[%c0_22, %c0_23] : memref<32x128xf32, #tpu.memory_space<vmem>>, vector<32x128xf32>
    %cst_24 = arith.constant dense<0.000000e+00> : vector<1x128xf32>
    %42 = tpu.matmul %40, %41, %cst_24 {dimension_numbers = #tpu.dot_dimension_numbers<[1], [0], [0], [1], [0, 0, 1, 1], [], []>} : vector<1x32xf32>, vector<32x128xf32>, vector<1x128xf32> -> vector<1x128xf32>
    %c0_25 = arith.constant 0 : index
    %c0_26 = arith.constant 0 : index
    %43 = vector.load %arg5[%c0_25, %c0_26] : memref<1x128xf32, #tpu.memory_space<vmem>>, vector<1x128xf32>
    %44 = arith.addf %42, %43 : vector<1x128xf32>
    %c0_27 = arith.constant 0 : index
    %c0_28 = arith.constant 0 : index
    %c0_29 = arith.constant 0 : index
    %45 = vector.load %arg6[%c0_27, %c0_28, %c0_29] : memref<1x1x128xf32, #tpu.memory_space<vmem>>, vector<1x1x128xf32>
    %46 = vector.shape_cast %45 : vector<1x1x128xf32> to vector<1x128xf32>
    %47 = vector.shape_cast %44 : vector<1x128xf32> to vector<1x1x128xf32>
    tpu.vector_store %arg6[%c0_27, %c0_28, %c0_29], %47 {strides = array<i32>} : memref<1x1x128xf32, #tpu.memory_space<vmem>>, vector<1x1x128xf32>,
    return
  }
  func.func @transform_0(%arg0: i32) -> (i32, i32, i32, i32) {
    %c0_i32 = arith.constant 0 : i32
    %c0_i32_0 = arith.constant 0 : i32
    %c0_i32_1 = arith.constant 0 : i32
    %c0_i32_2 = arith.constant 0 : i32
    return %arg0, %c0_i32, %c0_i32_0, %c0_i32_1 : i32, i32, i32, i32
  }
  func.func @transform_1(%arg0: i32) -> (i32, i32) {
    %c0_i32 = arith.constant 0 : i32
    %c0_i32_0 = arith.constant 0 : i32
    %c0_i32_1 = arith.constant 0 : i32
    return %c0_i32, %c0_i32_0 : i32, i32
  }
  func.func @transform_2(%arg0: i32) -> (i32, i32) {
    %c0_i32 = arith.constant 0 : i32
    %c0_i32_0 = arith.constant 0 : i32
    %c0_i32_1 = arith.constant 0 : i32
    return %c0_i32, %c0_i32_0 : i32, i32
  }
  func.func @transform_3(%arg0: i32) -> (i32, i32) {
    %c0_i32 = arith.constant 0 : i32
    %c0_i32_0 = arith.constant 0 : i32
    %c0_i32_1 = arith.constant 0 : i32
    return %c0_i32, %c0_i32_0 : i32, i32
  }
  func.func @transform_4(%arg0: i32) -> (i32, i32) {
    %c0_i32 = arith.constant 0 : i32
    %c0_i32_0 = arith.constant 0 : i32
    %c0_i32_1 = arith.constant 0 : i32
    return %c0_i32, %c0_i32_0 : i32, i32
  }
  func.func @transform_5(%arg0: i32) -> (i32, i32, i32) {
    %c0_i32 = arith.constant 0 : i32
    %c0_i32_0 = arith.constant 0 : i32
    %c0_i32_1 = arith.constant 0 : i32
    return %arg0, %c0_i32, %c0_i32_0 : i32, i32, i32
  }
}

</mosaic_0001>

<llo_original>
// kernel: tpu_custom_call.1
$region0: #{tpu_custom_call.1}
  #allocation0 [shape = 'u32[]', space=smem, size = 0x4, offset = 0x4, fixed_abs, tag = 'smem constant byte address 0x4 - core index']
  #allocation1 [shape = 'u32[144,128]{1,0:T(1,128)}', space=vmem, size = 0x12000, scoped, tag = 'internal scratch']
  #allocation2 [shape = 'bf16[256,36]{1,0:T(16,128)(2,1)}', space=vmem, size = 0x10000, scoped, tag = 'scratch operand']
  %s0 = inlined_call_operand.vmem [shape: bf16[2,18,18,4], index: 0, kind: input, shape index: {}]
  %s1 = inlined_call_operand.vmem [shape: bf16[36,32], index: 1, kind: input, shape index: {}]
  %s2 = inlined_call_operand.vmem [shape: f32[1,32], index: 2, kind: input, shape index: {}]
  %s3 = inlined_call_operand.vmem [shape: f32[32,128], index: 3, kind: input, shape index: {}]
  %s4 = inlined_call_operand.vmem [shape: f32[1,128], index: 4, kind: input, shape index: {}]
  %s5 = inlined_call_operand.hbm [shape: f32[2,1,128], index: 5, kind: output, shape index: {}]
  %s6 = sld [smem:[#allocation0]]
  $region53: #{tpu_custom_call.1} parent=0
    _
  %s8 = ssub.s32 1, %s6
  %s9 = scalar_select 0, %s8, %s6
  $region1: #{tpu_custom_call.1} parent=0
    #allocation3 [shape = 'u8[1024]{0}', space=vmem, size = 0x400, scoped, tag = 'output window, operand 0']
    #allocation4 [shape = 's32[2]{0}', space=sflag, size = 0x8, scoped, tag = 'scoped memory for tpu_custom_call.1']
    %10 = vsyncpa [#allocation4], 0
    %s11 = scalar_lea.sflag [#allocation4], 1
    %12 = vsyncpa %s11, 0
    loop: start=0, step=1, limit=4
    $region2: #{tpu_custom_call.1} parent=1 // loop_pre_header
      _
    $region3: #{tpu_custom_call.1} parent=1 // loop_header
      %s14 = sphi 0, %s18
      %p15 = scmp.ge.s32.totalorder %s14, 4
      %s24 = sphi 0, %s26
      %s27 = sphi 0, %s24
      %s28 = sphi 0, %s27
      %s44 = sphi 0, %s28
      %s48 = sphi 0, %s48
      %s50 = sphi 0, %s48
      %s51 = sphi 0, %s50
      %s65 = sphi 0, %s51
      %s69 = sphi 0, %s69
      %s71 = sphi 0, %s69
      %s72 = sphi 0, %s71
      %s86 = sphi 0, %s72
      %s90 = sphi 0, %s90
      %s92 = sphi 0, %s90
      %s93 = sphi 0, %s92
      %s107 = sphi 0, %s93
      %s111 = sphi 0, %s111
      %s113 = sphi 0, %s111
      %s114 = sphi 0, %s113
      %s128 = sphi 0, %s114
      %s134 = sphi 0, %s136
      %s137 = sphi 0, %s134
      %s138 = sphi 0, %s137
      %s154 = sphi 0, %s138
    $region4: #{tpu_custom_call.1} parent=1 // loop_header_branch
      %17 = sbr.rel (%p15) target = $region8
    $region5: #{tpu_custom_call.1} parent=1 // loop_body
      %s19 = ssub.s32 %s14, 1
      %s20 = ssub.s32 %s14, 2
      %s21 = sadd.s32 %s14, 1
      %s22 = ssub.s32 %s14, %s21
      %p23 = scmp.eq.s32.totalorder %s22, 0
      %s25 = sadd.s32 %s24, 1
      %s26 = scalar_select %p23, %s24, %s25
      %p29 = pneg %p23
      %p30 = scmp.eq.s32.totalorder %s14, 1
      %p31 = por %p29, %p30
      %p32 = scmp.ne.s32.totalorder %s24, %s27
      %p33 = scmp.eq.s32.totalorder %s14, 0
      %p34 = por %p32, %p33
      %p35 = scmp.ne.s32.totalorder %s24, %s27
      %p36 = scmp.eq.s32.totalorder %s19, 1
      %p37 = por %p35, %p36
      %p38 = scmp.ne.s32.totalorder %s27, %s28
      %p39 = scmp.eq.s32.totalorder %s19, 0
      %p40 = por %p38, %p39
      %p41 = scmp.ne.s32.totalorder %s27, %s28
      %p42 = scmp.eq.s32.totalorder %s20, 1
      %p43 = por %p41, %p42
      %p45 = scmp.ne.s32.totalorder %s28, %s44
      %p46 = scmp.eq.s32.totalorder %s20, 0
      %p47 = por %p45, %p46
      %s49 = sadd.s32 %s48, 1
      %p52 = scmp.eq.s32.totalorder %s14, 1
      %p53 = scmp.ne.s32.totalorder %s48, %s50
      %p54 = scmp.eq.s32.totalorder %s14, 0
      %p55 = por %p53, %p54
      %p56 = scmp.ne.s32.totalorder %s48, %s50
      %p57 = scmp.eq.s32.totalorder %s19, 1
      %p58 = por %p56, %p57
      %p59 = scmp.ne.s32.totalorder %s50, %s51
      %p60 = scmp.eq.s32.totalorder %s19, 0
      %p61 = por %p59, %p60
      %p62 = scmp.ne.s32.totalorder %s50, %s51
      %p63 = scmp.eq.s32.totalorder %s20, 1
      %p64 = por %p62, %p63
      %p66 = scmp.ne.s32.totalorder %s51, %s65
      %p67 = scmp.eq.s32.totalorder %s20, 0
      %p68 = por %p66, %p67
      %s70 = sadd.s32 %s69, 1
      %p73 = scmp.eq.s32.totalorder %s14, 1
      %p74 = scmp.ne.s32.totalorder %s69, %s71
      %p75 = scmp.eq.s32.totalorder %s14, 0
      %p76 = por %p74, %p75
      %p77 = scmp.ne.s32.totalorder %s69, %s71
      %p78 = scmp.eq.s32.totalorder %s19, 1
      %p79 = por %p77, %p78
      %p80 = scmp.ne.s32.totalorder %s71, %s72
      %p81 = scmp.eq.s32.totalorder %s19, 0
      %p82 = por %p80, %p81
      %p83 = scmp.ne.s32.totalorder %s71, %s72
      %p84 = scmp.eq.s32.totalorder %s20, 1
      %p85 = por %p83, %p84
      %p87 = scmp.ne.s32.totalorder %s72, %s86
      %p88 = scmp.eq.s32.totalorder %s20, 0
      %p89 = por %p87, %p88
      %s91 = sadd.s32 %s90, 1
      %p94 = scmp.eq.s32.totalorder %s14, 1
      %p95 = scmp.ne.s32.totalorder %s90, %s92
      %p96 = scmp.eq.s32.totalorder %s14, 0
      %p97 = por %p95, %p96
      %p98 = scmp.ne.s32.totalorder %s90, %s92
      %p99 = scmp.eq.s32.totalorder %s19, 1
      %p100 = por %p98, %p99
      %p101 = scmp.ne.s32.totalorder %s92, %s93
      %p102 = scmp.eq.s32.totalorder %s19, 0
      %p103 = por %p101, %p102
      %p104 = scmp.ne.s32.totalorder %s92, %s93
      %p105 = scmp.eq.s32.totalorder %s20, 1
      %p106 = por %p104, %p105
      %p108 = scmp.ne.s32.totalorder %s93, %s107
      %p109 = scmp.eq.s32.totalorder %s20, 0
      %p110 = por %p108, %p109
      %s112 = sadd.s32 %s111, 1
      %p115 = scmp.eq.s32.totalorder %s14, 1
      %p116 = scmp.ne.s32.totalorder %s111, %s113
      %p117 = scmp.eq.s32.totalorder %s14, 0
      %p118 = por %p116, %p117
      %p119 = scmp.ne.s32.totalorder %s111, %s113
      %p120 = scmp.eq.s32.totalorder %s19, 1
      %p121 = por %p119, %p120
      %p122 = scmp.ne.s32.totalorder %s113, %s114
      %p123 = scmp.eq.s32.totalorder %s19, 0
      %p124 = por %p122, %p123
      %p125 = scmp.ne.s32.totalorder %s113, %s114
      %p126 = scmp.eq.s32.totalorder %s20, 1
      %p127 = por %p125, %p126
      %p129 = scmp.ne.s32.totalorder %s114, %s128
      %p130 = scmp.eq.s32.totalorder %s20, 0
      %p131 = por %p129, %p130
      %s132 = ssub.s32 %s14, %s21
      %p133 = scmp.eq.s32.totalorder %s132, 0
      %s135 = sadd.s32 %s134, 1
      %s136 = scalar_select %p133, %s134, %s135
      %p139 = pneg %p133
      %p140 = scmp.eq.s32.totalorder %s14, 1
      %p141 = por %p139, %p140
      %p142 = scmp.ne.s32.totalorder %s134, %s137
      %p143 = scmp.eq.s32.totalorder %s14, 0
      %p144 = por %p142, %p143
      %p145 = scmp.ne.s32.totalorder %s134, %s137
      %p146 = scmp.eq.s32.totalorder %s19, 1
      %p147 = por %p145, %p146
      %p148 = scmp.ne.s32.totalorder %s137, %s138
      %p149 = scmp.eq.s32.totalorder %s19, 0
      %p150 = por %p148, %p149
      %p151 = scmp.ne.s32.totalorder %s137, %s138
      %p152 = scmp.eq.s32.totalorder %s20, 1
      %p153 = por %p151, %p152
      %p155 = scmp.ne.s32.totalorder %s138, %s154
      %p156 = scmp.eq.s32.totalorder %s20, 0
      %p157 = por %p155, %p156
      %p158 = scmp.le.s32.totalorder 1, %s14
      %p159 = scmp.lt.s32.totalorder %s14, 3
      %p160 = pnand %p158, %p159
      %p161 = pneg %p160
      // Predicated region
      $region9: #{tpu_custom_call.1} parent=5 // pred_check
        _
      $region10: #{tpu_custom_call.1} parent=5 // pred_check_branch
        %163 = sbr.rel (%p160) target = $region12
      $region11: #{tpu_custom_call.1} parent=5 // pred_region
        %s164 = ssub.s32 %s14, 1
        // Predicated region
        $region13: #{tpu_custom_call.1} parent=11 // pred_check
          %p165 = pneg %p61
        $region14: #{tpu_custom_call.1} parent=11 // pred_check_branch
          %167 = sbr.rel (%p165) target = $region16
        $region15: #{tpu_custom_call.1} parent=11 // pred_region
          _
        $region16: #{tpu_custom_call.1} parent=11 // pred_fallthru
          _
        // Predicated region
        $region17: #{tpu_custom_call.1} parent=11 // pred_check
          %p168 = pneg %p82
        $region18: #{tpu_custom_call.1} parent=11 // pred_check_branch
          %170 = sbr.rel (%p168) target = $region20
        $region19: #{tpu_custom_call.1} parent=11 // pred_region
          _
        $region20: #{tpu_custom_call.1} parent=11 // pred_fallthru
          _
        // Predicated region
        $region21: #{tpu_custom_call.1} parent=11 // pred_check
          %p171 = pneg %p103
        $region22: #{tpu_custom_call.1} parent=11 // pred_check_branch
          %173 = sbr.rel (%p171) target = $region24
        $region23: #{tpu_custom_call.1} parent=11 // pred_region
          _
        $region24: #{tpu_custom_call.1} parent=11 // pred_fallthru
          _
        // Predicated region
        $region25: #{tpu_custom_call.1} parent=11 // pred_check
          %p174 = pneg %p124
        $region26: #{tpu_custom_call.1} parent=11 // pred_check_branch
          %176 = sbr.rel (%p174) target = $region28
        $region27: #{tpu_custom_call.1} parent=11 // pred_region
          _
        $region28: #{tpu_custom_call.1} parent=11 // pred_fallthru
          _
      $region12: #{tpu_custom_call.1} parent=5 // pred_fallthru
        _
      %p177 = scmp.lt.s32.totalorder %s14, 2
      // Predicated region
      $region29: #{tpu_custom_call.1} parent=5 // pred_check
        %p178 = pneg %p177
      $region30: #{tpu_custom_call.1} parent=5 // pred_check_branch
        %180 = sbr.rel (%p178) target = $region32
      $region31: #{tpu_custom_call.1} parent=5 // pred_region
        // Predicated region
        $region33: #{tpu_custom_call.1} parent=31 // pred_check
          %p181 = pneg %p34
        $region34: #{tpu_custom_call.1} parent=31 // pred_check_branch
          %183 = sbr.rel (%p181) target = $region36
        $region35: #{tpu_custom_call.1} parent=31 // pred_region
          %p184 = scmp.lt.s32.totalorder %s14, 1
          %s185 = scalar_select %p184, %s14, 1
          %s186 = smul.addr %s185, 54
          %s187 = smul.addr %s186, 4
          %s188 = scalar_lea.vmem %s0, %s187
        $region36: #{tpu_custom_call.1} parent=31 // pred_fallthru
          _
      $region32: #{tpu_custom_call.1} parent=5 // pred_fallthru
        _
      %p189 = scmp.le.s32.totalorder 1, %s14
      %p190 = scmp.lt.s32.totalorder %s14, 3
      %p191 = pnand %p189, %p190
      %p192 = pneg %p191
      // Predicated region
      $region37: #{tpu_custom_call.1} parent=5 // pred_check
        _
      $region38: #{tpu_custom_call.1} parent=5 // pred_check_branch
        %194 = sbr.rel (%p191) target = $region40
      $region39: #{tpu_custom_call.1} parent=5 // pred_region
        %s195 = ssub.s32 %s14, 1
        %p196 = scmp.lt.s32.totalorder %s19, 1
        %s197 = scalar_select %p196, %s19, 1
        %s198 = smul.addr %s197, 54
        %s199 = smul.addr %s198, 4
        %s200 = scalar_lea.vmem %s0, %s199
        %p201 = pneg %p40
        %p202 = pneg %p37
        %p203 = pneg %p61
        %p204 = pneg %p58
        %p205 = pneg %p82
        %p206 = pneg %p79
        %p207 = pneg %p103
        %p208 = pneg %p100
        %p209 = pneg %p124
        %p210 = pneg %p121
        %p211 = pneg %p150
        %p212 = pneg %p147
        %s213 = sand.u32 %s137, 1
        %s214 = scalar_lea.sflag [#allocation4], %s213
        %s215 = sand.u32 %s137, 1
        %s216 = scalar_lea.vmem [#allocation3], %s215
        %p217 = scmp.lt.s32.totalorder %s19, 1
        %s218 = scalar_select %p217, %s19, 1
        %s219 = smul.addr %s218, 54
        %s220 = smul.addr %s219, 4
        %s221 = scalar_lea.vmem %s0, %s220
        %v223 = vld [vmem:[%s221] sm:$0xf]
        %v224 = vld [vmem:[%s221 + $0x4] sm:$0xf]
        %v225 = vld [vmem:[%s221 + $0x8] sm:$0x1]
        %v226 = vld [vmem:[%s221 + $0xc] sm:$0xf]
        %v227 = vld [vmem:[%s221 + $0x10] sm:$0xf]
        %v228 = vld [vmem:[%s221 + $0x14] sm:$0x1]
        %v229 = vld [vmem:[%s221 + $0x18] sm:$0xf]
        %v230 = vld [vmem:[%s221 + $0x1c] sm:$0xf]
        %v231 = vld [vmem:[%s221 + $0x20] sm:$0x1]
        %v232 = vld [vmem:[%s221 + $0x24] sm:$0xf]
        %v233 = vld [vmem:[%s221 + $0x28] sm:$0xf]
        %v234 = vld [vmem:[%s221 + $0x2c] sm:$0x1]
        %v235 = vld [vmem:[%s221 + $0x30] sm:$0xf]
        %v236 = vld [vmem:[%s221 + $0x34] sm:$0xf]
        %v237 = vld [vmem:[%s221 + $0x38] sm:$0x1]
        %v238 = vld [vmem:[%s221 + $0x3c] sm:$0xf]
        %v239 = vld [vmem:[%s221 + $0x40] sm:$0xf]
        %v240 = vld [vmem:[%s221 + $0x44] sm:$0x1]
        %v241 = vld [vmem:[%s221 + $0x48] sm:$0xf]
        %v242 = vld [vmem:[%s221 + $0x4c] sm:$0xf]
        %v243 = vld [vmem:[%s221 + $0x50] sm:$0x1]
        %v244 = vld [vmem:[%s221 + $0x54] sm:$0xf]
        %v245 = vld [vmem:[%s221 + $0x58] sm:$0xf]
        %v246 = vld [vmem:[%s221 + $0x5c] sm:$0x1]
        %v247 = vld [vmem:[%s221 + $0x60] sm:$0xf]
        %v248 = vld [vmem:[%s221 + $0x64] sm:$0xf]
        %v249 = vld [vmem:[%s221 + $0x68] sm:$0x1]
        %v250 = vld [vmem:[%s221 + $0x6c] sm:$0xf]
        %v251 = vld [vmem:[%s221 + $0x70] sm:$0xf]
        %v252 = vld [vmem:[%s221 + $0x74] sm:$0x1]
        %v253 = vld [vmem:[%s221 + $0x78] sm:$0xf]
        %v254 = vld [vmem:[%s221 + $0x7c] sm:$0xf]
        %v255 = vld [vmem:[%s221 + $0x80] sm:$0x1]
        %v256 = vld [vmem:[%s221 + $0x84] sm:$0xf]
        %v257 = vld [vmem:[%s221 + $0x88] sm:$0xf]
        %v258 = vld [vmem:[%s221 + $0x8c] sm:$0x1]
        %v259 = vld [vmem:[%s221 + $0x90] sm:$0xf]
        %v260 = vld [vmem:[%s221 + $0x94] sm:$0xf]
        %v261 = vld [vmem:[%s221 + $0x98] sm:$0x1]
        %v262 = vld [vmem:[%s221 + $0x9c] sm:$0xf]
        %v263 = vld [vmem:[%s221 + $0xa0] sm:$0xf]
        %v264 = vld [vmem:[%s221 + $0xa4] sm:$0x1]
        %v265 = vld [vmem:[%s221 + $0xa8] sm:$0xf]
        %v266 = vld [vmem:[%s221 + $0xac] sm:$0xf]
        %v267 = vld [vmem:[%s221 + $0xb0] sm:$0x1]
        %v268 = vld [vmem:[%s221 + $0xb4] sm:$0xf]
        %v269 = vld [vmem:[%s221 + $0xb8] sm:$0xf]
        %v270 = vld [vmem:[%s221 + $0xbc] sm:$0x1]
        %v271 = vld [vmem:[%s221 + $0xc0] sm:$0xf]
        %v272 = vld [vmem:[%s221 + $0xc4] sm:$0xf]
        %v273 = vld [vmem:[%s221 + $0xc8] sm:$0x1]
        %v274 = vld [vmem:[%s221 + $0xcc] sm:$0xf]
        %v275 = vld [vmem:[%s221 + $0xd0] sm:$0xf]
        %v276 = vld [vmem:[%s221 + $0xd4] sm:$0x1]
        %v309 = vunpack.c.l.b16 %v223
        %v310 = vunpack.c.l.b16 %v224
        %v311 = vunpack.c.l.b16 %v226
        %v312 = vunpack.c.l.b16 %v227
        %v313 = vunpack.c.l.b16 %v229
        %v314 = vunpack.c.l.b16 %v230
        %v315 = vunpack.c.l.b16 %v232
        %v316 = vunpack.c.l.b16 %v233
        %v317 = vunpack.c.l.b16 %v235
        %v318 = vunpack.c.l.b16 %v236
        %v319 = vunpack.c.l.b16 %v238
        %v320 = vunpack.c.l.b16 %v239
        %v321 = vunpack.c.l.b16 %v241
        %v322 = vunpack.c.l.b16 %v242
        %v323 = vunpack.c.l.b16 %v244
        %v324 = vunpack.c.l.b16 %v245
        %v325 = vunpack.c.l.b16 %v247
        %v326 = vunpack.c.l.b16 %v248
        %v327 = vunpack.c.l.b16 %v250
        %v328 = vunpack.c.l.b16 %v251
        %v329 = vunpack.c.l.b16 %v253
        %v330 = vunpack.c.l.b16 %v254
        %v331 = vunpack.c.l.b16 %v256
        %v332 = vunpack.c.l.b16 %v257
        %v333 = vunpack.c.l.b16 %v259
        %v334 = vunpack.c.l.b16 %v260
        %v335 = vunpack.c.l.b16 %v262
        %v336 = vunpack.c.l.b16 %v263
        %v337 = vunpack.c.l.b16 %v265
        %v338 = vunpack.c.l.b16 %v266
        %v339 = vunpack.c.l.b16 %v268
        %v340 = vunpack.c.l.b16 %v269
        %v341 = vpack.c.b16 %v310, %v309
        %v342 = vpack.c.b16 %v312, %v311
        %v343 = vpack.c.b16 %v314, %v313
        %v344 = vpack.c.b16 %v316, %v315
        %v345 = vpack.c.b16 %v318, %v317
        %v346 = vpack.c.b16 %v320, %v319
        %v347 = vpack.c.b16 %v322, %v321
        %v348 = vpack.c.b16 %v324, %v323
        %v349 = vpack.c.b16 %v326, %v325
        %v350 = vpack.c.b16 %v328, %v327
        %v351 = vpack.c.b16 %v330, %v329
        %v352 = vpack.c.b16 %v332, %v331
        %v353 = vpack.c.b16 %v334, %v333
        %v354 = vpack.c.b16 %v336, %v335
        %v355 = vpack.c.b16 %v338, %v337
        %v356 = vpack.c.b16 %v340, %v339
        %vm373 = vcmask 31744
        %374 = vst.msk [vmem:[#allocation2] sm:$0xff] %vm373, %v341
        %375 = vst.msk [vmem:[#allocation2 + $0x8] sm:$0xff] %vm373, %v342
        %376 = vst.msk [vmem:[#allocation2 + $0x10] sm:$0xff] %vm373, %v343
        %377 = vst.msk [vmem:[#allocation2 + $0x18] sm:$0xff] %vm373, %v344
        %378 = vst.msk [vmem:[#allocation2 + $0x20] sm:$0xff] %vm373, %v345
        %379 = vst.msk [vmem:[#allocation2 + $0x28] sm:$0xff] %vm373, %v346
        %380 = vst.msk [vmem:[#allocation2 + $0x30] sm:$0xff] %vm373, %v347
        %381 = vst.msk [vmem:[#allocation2 + $0x38] sm:$0xff] %vm373, %v348
        %382 = vst.msk [vmem:[#allocation2 + $0x40] sm:$0xff] %vm373, %v349
        %383 = vst.msk [vmem:[#allocation2 + $0x48] sm:$0xff] %vm373, %v350
        %384 = vst.msk [vmem:[#allocation2 + $0x50] sm:$0xff] %vm373, %v351
        %385 = vst.msk [vmem:[#allocation2 + $0x58] sm:$0xff] %vm373, %v352
        %386 = vst.msk [vmem:[#allocation2 + $0x60] sm:$0xff] %vm373, %v353
        %387 = vst.msk [vmem:[#allocation2 + $0x68] sm:$0xff] %vm373, %v354
        %388 = vst.msk [vmem:[#allocation2 + $0x70] sm:$0xff] %vm373, %v355
        %389 = vst.msk [vmem:[#allocation2 + $0x78] sm:$0xff] %vm373, %v356
        %vm390 = vsmask.f32 3328
        %vm391 = vsmask.f32 7440
        %vm392 = vmor %vm390, %vm391
        %v394 = vshrl.u32 %v223, 16
        %v396 = vrot.slane %v394, 4
        %v397 = vshll.u32 %v223, 16
        %v399 = vrot.slane %v397, 5
        %v400 = vor.u32 %v396, %v399
        %v401 = vrot.slane %v400, 4
        %v403 = vshll.u32 %v224, 16
        %v405 = vrot.slane %v403, 5
        %v406 = vsel %vm392, %v401, %v405
        %v407 = vshrl.u32 %v224, 16
        %v409 = vrot.slane %v407, 4
        %v410 = vor.u32 %v409, %v405
        %v411 = vrot.slane %v410, 4
        %v413 = vshll.u32 %v225, 16
        %v415 = vrot.slane %v413, 5
        %v416 = vsel %vm392, %v411, %v415
        %v418 = vshrl.u32 %v226, 16
        %v420 = vrot.slane %v418, 4
        %v421 = vshll.u32 %v226, 16
        %v423 = vrot.slane %v421, 5
        %v424 = vor.u32 %v420, %v423
        %v425 = vrot.slane %v424, 4
        %v427 = vshll.u32 %v227, 16
        %v429 = vrot.slane %v427, 5
        %v430 = vsel %vm392, %v425, %v429
        %v431 = vshrl.u32 %v227, 16
        %v433 = vrot.slane %v431, 4
        %v434 = vor.u32 %v433, %v429
        %v435 = vrot.slane %v434, 4
        %v437 = vshll.u32 %v228, 16
        %v439 = vrot.slane %v437, 5
        %v440 = vsel %vm392, %v435, %v439
        %v442 = vshrl.u32 %v229, 16
        %v444 = vrot.slane %v442, 4
        %v445 = vshll.u32 %v229, 16
        %v447 = vrot.slane %v445, 5
        %v448 = vor.u32 %v444, %v447
        %v449 = vrot.slane %v448, 4
        %v451 = vshll.u32 %v230, 16
        %v453 = vrot.slane %v451, 5
        %v454 = vsel %vm392, %v449, %v453
        %v455 = vshrl.u32 %v230, 16
        %v457 = vrot.slane %v455, 4
        %v458 = vor.u32 %v457, %v453
        %v459 = vrot.slane %v458, 4
        %v461 = vshll.u32 %v231, 16
        %v463 = vrot.slane %v461, 5
        %v464 = vsel %vm392, %v459, %v463
        %v466 = vshrl.u32 %v232, 16
        %v468 = vrot.slane %v466, 4
        %v469 = vshll.u32 %v232, 16
        %v471 = vrot.slane %v469, 5
        %v472 = vor.u32 %v468, %v471
        %v473 = vrot.slane %v472, 4
        %v475 = vshll.u32 %v233, 16
        %v477 = vrot.slane %v475, 5
        %v478 = vsel %vm392, %v473, %v477
        %v479 = vshrl.u32 %v233, 16
        %v481 = vrot.slane %v479, 4
        %v482 = vor.u32 %v481, %v477
        %v483 = vrot.slane %v482, 4
        %v485 = vshll.u32 %v234, 16
        %v487 = vrot.slane %v485, 5
        %v488 = vsel %vm392, %v483, %v487
        %v490 = vshrl.u32 %v235, 16
        %v492 = vrot.slane %v490, 4
        %v493 = vshll.u32 %v235, 16
        %v495 = vrot.slane %v493, 5
        %v496 = vor.u32 %v492, %v495
        %v497 = vrot.slane %v496, 4
        %v499 = vshll.u32 %v236, 16
        %v501 = vrot.slane %v499, 5
        %v502 = vsel %vm392, %v497, %v501
        %v503 = vshrl.u32 %v236, 16
        %v505 = vrot.slane %v503, 4
        %v506 = vor.u32 %v505, %v501
        %v507 = vrot.slane %v506, 4
        %v509 = vshll.u32 %v237, 16
        %v511 = vrot.slane %v509, 5
        %v512 = vsel %vm392, %v507, %v511
        %v514 = vshrl.u32 %v238, 16
        %v516 = vrot.slane %v514, 4
        %v517 = vshll.u32 %v238, 16
        %v519 = vrot.slane %v517, 5
        %v520 = vor.u32 %v516, %v519
        %v521 = vrot.slane %v520, 4
        %v523 = vshll.u32 %v239, 16
        %v525 = vrot.slane %v523, 5
        %v526 = vsel %vm392, %v521, %v525
        %v527 = vshrl.u32 %v239, 16
        %v529 = vrot.slane %v527, 4
        %v530 = vor.u32 %v529, %v525
        %v531 = vrot.slane %v530, 4
        %v533 = vshll.u32 %v240, 16
        %v535 = vrot.slane %v533, 5
        %v536 = vsel %vm392, %v531, %v535
        %v538 = vshrl.u32 %v241, 16
        %v540 = vrot.slane %v538, 4
        %v541 = vshll.u32 %v241, 16
        %v543 = vrot.slane %v541, 5
        %v544 = vor.u32 %v540, %v543
        %v545 = vrot.slane %v544, 4
        %v547 = vshll.u32 %v242, 16
        %v549 = vrot.slane %v547, 5
        %v550 = vsel %vm392, %v545, %v549
        %v551 = vshrl.u32 %v242, 16
        %v553 = vrot.slane %v551, 4
        %v554 = vor.u32 %v553, %v549
        %v555 = vrot.slane %v554, 4
        %v557 = vshll.u32 %v243, 16
        %v559 = vrot.slane %v557, 5
        %v560 = vsel %vm392, %v555, %v559
        %v562 = vshrl.u32 %v244, 16
        %v564 = vrot.slane %v562, 4
        %v565 = vshll.u32 %v244, 16
        %v567 = vrot.slane %v565, 5
        %v568 = vor.u32 %v564, %v567
        %v569 = vrot.slane %v568, 4
        %v571 = vshll.u32 %v245, 16
        %v573 = vrot.slane %v571, 5
        %v574 = vsel %vm392, %v569, %v573
        %v575 = vshrl.u32 %v245, 16
        %v577 = vrot.slane %v575, 4
        %v578 = vor.u32 %v577, %v573
        %v579 = vrot.slane %v578, 4
        %v581 = vshll.u32 %v246, 16
        %v583 = vrot.slane %v581, 5
        %v584 = vsel %vm392, %v579, %v583
        %v586 = vshrl.u32 %v247, 16
        %v588 = vrot.slane %v586, 4
        %v589 = vshll.u32 %v247, 16
        %v591 = vrot.slane %v589, 5
        %v592 = vor.u32 %v588, %v591
        %v593 = vrot.slane %v592, 4
        %v595 = vshll.u32 %v248, 16
        %v597 = vrot.slane %v595, 5
        %v598 = vsel %vm392, %v593, %v597
        %v599 = vshrl.u32 %v248, 16
        %v601 = vrot.slane %v599, 4
        %v602 = vor.u32 %v601, %v597
        %v603 = vrot.slane %v602, 4
        %v605 = vshll.u32 %v249, 16
        %v607 = vrot.slane %v605, 5
        %v608 = vsel %vm392, %v603, %v607
        %v610 = vshrl.u32 %v250, 16
        %v612 = vrot.slane %v610, 4
        %v613 = vshll.u32 %v250, 16
        %v615 = vrot.slane %v613, 5
        %v616 = vor.u32 %v612, %v615
        %v617 = vrot.slane %v616, 4
        %v619 = vshll.u32 %v251, 16
        %v621 = vrot.slane %v619, 5
        %v622 = vsel %vm392, %v617, %v621
        %v623 = vshrl.u32 %v251, 16
        %v625 = vrot.slane %v623, 4
        %v626 = vor.u32 %v625, %v621
        %v627 = vrot.slane %v626, 4
        %v629 = vshll.u32 %v252, 16
        %v631 = vrot.slane %v629, 5
        %v632 = vsel %vm392, %v627, %v631
        %v634 = vshrl.u32 %v253, 16
        %v636 = vrot.slane %v634, 4
        %v637 = vshll.u32 %v253, 16
        %v639 = vrot.slane %v637, 5
        %v640 = vor.u32 %v636, %v639
        %v641 = vrot.slane %v640, 4
        %v643 = vshll.u32 %v254, 16
        %v645 = vrot.slane %v643, 5
        %v646 = vsel %vm392, %v641, %v645
        %v647 = vshrl.u32 %v254, 16
        %v649 = vrot.slane %v647, 4
        %v650 = vor.u32 %v649, %v645
        %v651 = vrot.slane %v650, 4
        %v653 = vshll.u32 %v255, 16
        %v655 = vrot.slane %v653, 5
        %v656 = vsel %vm392, %v651, %v655
        %v658 = vshrl.u32 %v256, 16
        %v660 = vrot.slane %v658, 4
        %v661 = vshll.u32 %v256, 16
        %v663 = vrot.slane %v661, 5
        %v664 = vor.u32 %v660, %v663
        %v665 = vrot.slane %v664, 4
        %v667 = vshll.u32 %v257, 16
        %v669 = vrot.slane %v667, 5
        %v670 = vsel %vm392, %v665, %v669
        %v671 = vshrl.u32 %v257, 16
        %v673 = vrot.slane %v671, 4
        %v674 = vor.u32 %v673, %v669
        %v675 = vrot.slane %v674, 4
        %v677 = vshll.u32 %v258, 16
        %v679 = vrot.slane %v677, 5
        %v680 = vsel %vm392, %v675, %v679
        %v682 = vshrl.u32 %v259, 16
        %v684 = vrot.slane %v682, 4
        %v685 = vshll.u32 %v259, 16
        %v687 = vrot.slane %v685, 5
        %v688 = vor.u32 %v684, %v687
        %v689 = vrot.slane %v688, 4
        %v691 = vshll.u32 %v260, 16
        %v693 = vrot.slane %v691, 5
        %v694 = vsel %vm392, %v689, %v693
        %v695 = vshrl.u32 %v260, 16
        %v697 = vrot.slane %v695, 4
        %v698 = vor.u32 %v697, %v693
        %v699 = vrot.slane %v698, 4
        %v701 = vshll.u32 %v261, 16
        %v703 = vrot.slane %v701, 5
        %v704 = vsel %vm392, %v699, %v703
        %v706 = vshrl.u32 %v262, 16
        %v708 = vrot.slane %v706, 4
        %v709 = vshll.u32 %v262, 16
        %v711 = vrot.slane %v709, 5
        %v712 = vor.u32 %v708, %v711
        %v713 = vrot.slane %v712, 4
        %v715 = vshll.u32 %v263, 16
        %v717 = vrot.slane %v715, 5
        %v718 = vsel %vm392, %v713, %v717
        %v719 = vshrl.u32 %v263, 16
        %v721 = vrot.slane %v719, 4
        %v722 = vor.u32 %v721, %v717
        %v723 = vrot.slane %v722, 4
        %v725 = vshll.u32 %v264, 16
        %v727 = vrot.slane %v725, 5
        %v728 = vsel %vm392, %v723, %v727
        %v730 = vshrl.u32 %v265, 16
        %v732 = vrot.slane %v730, 4
        %v733 = vshll.u32 %v265, 16
        %v735 = vrot.slane %v733, 5
        %v736 = vor.u32 %v732, %v735
        %v737 = vrot.slane %v736, 4
        %v739 = vshll.u32 %v266, 16
        %v741 = vrot.slane %v739, 5
        %v742 = vsel %vm392, %v737, %v741
        %v743 = vshrl.u32 %v266, 16
        %v745 = vrot.slane %v743, 4
        %v746 = vor.u32 %v745, %v741
        %v747 = vrot.slane %v746, 4
        %v749 = vshll.u32 %v267, 16
        %v751 = vrot.slane %v749, 5
        %v752 = vsel %vm392, %v747, %v751
        %v754 = vshrl.u32 %v268, 16
        %v756 = vrot.slane %v754, 4
        %v757 = vshll.u32 %v268, 16
        %v759 = vrot.slane %v757, 5
        %v760 = vor.u32 %v756, %v759
        %v761 = vrot.slane %v760, 4
        %v763 = vshll.u32 %v269, 16
        %v765 = vrot.slane %v763, 5
        %v766 = vsel %vm392, %v761, %v765
        %v767 = vshrl.u32 %v269, 16
        %v769 = vrot.slane %v767, 4
        %v770 = vor.u32 %v769, %v765
        %v771 = vrot.slane %v770, 4
        %v773 = vshll.u32 %v270, 16
        %v775 = vrot.slane %v773, 5
        %v776 = vsel %vm392, %v771, %v775
        %v777 = vunpack.c.l.b16 %v406
        %v778 = vunpack.c.l.b16 %v416
        %v779 = vunpack.c.l.b16 %v430
        %v780 = vunpack.c.l.b16 %v440
        %v781 = vunpack.c.l.b16 %v454
        %v782 = vunpack.c.l.b16 %v464
        %v783 = vunpack.c.l.b16 %v478
        %v784 = vunpack.c.l.b16 %v488
        %v785 = vunpack.c.l.b16 %v502
        %v786 = vunpack.c.l.b16 %v512
        %v787 = vunpack.c.l.b16 %v526
        %v788 = vunpack.c.l.b16 %v536
        %v789 = vunpack.c.l.b16 %v550
        %v790 = vunpack.c.l.b16 %v560
        %v791 = vunpack.c.l.b16 %v574
        %v792 = vunpack.c.l.b16 %v584
        %v793 = vunpack.c.l.b16 %v598
        %v794 = vunpack.c.l.b16 %v608
        %v795 = vunpack.c.l.b16 %v622
        %v796 = vunpack.c.l.b16 %v632
        %v797 = vunpack.c.l.b16 %v646
        %v798 = vunpack.c.l.b16 %v656
        %v799 = vunpack.c.l.b16 %v670
        %v800 = vunpack.c.l.b16 %v680
        %v801 = vunpack.c.l.b16 %v694
        %v802 = vunpack.c.l.b16 %v704
        %v803 = vunpack.c.l.b16 %v718
        %v804 = vunpack.c.l.b16 %v728
        %v805 = vunpack.c.l.b16 %v742
        %v806 = vunpack.c.l.b16 %v752
        %v807 = vunpack.c.l.b16 %v766
        %v808 = vunpack.c.l.b16 %v776
        %v809 = vpack.c.b16 %v778, %v777
        %v810 = vpack.c.b16 %v780, %v779
        %v811 = vpack.c.b16 %v782, %v781
        %v812 = vpack.c.b16 %v784, %v783
        %v813 = vpack.c.b16 %v786, %v785
        %v814 = vpack.c.b16 %v788, %v787
        %v815 = vpack.c.b16 %v790, %v789
        %v816 = vpack.c.b16 %v792, %v791
        %v817 = vpack.c.b16 %v794, %v793
        %v818 = vpack.c.b16 %v796, %v795
        %v819 = vpack.c.b16 %v798, %v797
        %v820 = vpack.c.b16 %v800, %v799
        %v821 = vpack.c.b16 %v802, %v801
        %v822 = vpack.c.b16 %v804, %v803
        %v823 = vpack.c.b16 %v806, %v805
        %v824 = vpack.c.b16 %v808, %v807
        %825 = vrot.lane.b32.xlu0 %v809, 4
        %v826 = vpop.permute.xlu0 %825
        %827 = vrot.lane.b32.xlu0 %v810, 4
        %v828 = vpop.permute.xlu0 %827
        %829 = vrot.lane.b32.xlu0 %v811, 4
        %v830 = vpop.permute.xlu0 %829
        %831 = vrot.lane.b32.xlu0 %v812, 4
        %v832 = vpop.permute.xlu0 %831
        %833 = vrot.lane.b32.xlu0 %v813, 4
        %v834 = vpop.permute.xlu0 %833
        %835 = vrot.lane.b32.xlu0 %v814, 4
        %v836 = vpop.permute.xlu0 %835
        %837 = vrot.lane.b32.xlu0 %v815, 4
        %v838 = vpop.permute.xlu0 %837
        %839 = vrot.lane.b32.xlu0 %v816, 4
        %v840 = vpop.permute.xlu0 %839
        %841 = vrot.lane.b32.xlu0 %v817, 4
        %v842 = vpop.permute.xlu0 %841
        %843 = vrot.lane.b32.xlu0 %v818, 4
        %v844 = vpop.permute.xlu0 %843
        %845 = vrot.lane.b32.xlu0 %v819, 4
        %v846 = vpop.permute.xlu0 %845
        %847 = vrot.lane.b32.xlu0 %v820, 4
        %v848 = vpop.permute.xlu0 %847
        %849 = vrot.lane.b32.xlu0 %v821, 4
        %v850 = vpop.permute.xlu0 %849
        %851 = vrot.lane.b32.xlu0 %v822, 4
        %v852 = vpop.permute.xlu0 %851
        %853 = vrot.lane.b32.xlu0 %v823, 4
        %v854 = vpop.permute.xlu0 %853
        %855 = vrot.lane.b32.xlu0 %v824, 4
        %v856 = vpop.permute.xlu0 %855
        %vm873 = vcmask 64544
        %874 = vst.msk [vmem:[#allocation2] sm:$0xff] %vm873, %v826
        %875 = vst.msk [vmem:[#allocation2 + $0x8] sm:$0xff] %vm873, %v828
        %876 = vst.msk [vmem:[#allocation2 + $0x10] sm:$0xff] %vm873, %v830
        %877 = vst.msk [vmem:[#allocation2 + $0x18] sm:$0xff] %vm873, %v832
        %878 = vst.msk [vmem:[#allocation2 + $0x20] sm:$0xff] %vm873, %v834
        %879 = vst.msk [vmem:[#allocation2 + $0x28] sm:$0xff] %vm873, %v836
        %880 = vst.msk [vmem:[#allocation2 + $0x30] sm:$0xff] %vm873, %v838
        %881 = vst.msk [vmem:[#allocation2 + $0x38] sm:$0xff] %vm873, %v840
        %882 = vst.msk [vmem:[#allocation2 + $0x40] sm:$0xff] %vm873, %v842
        %883 = vst.msk [vmem:[#allocation2 + $0x48] sm:$0xff] %vm873, %v844
        %884 = vst.msk [vmem:[#allocation2 + $0x50] sm:$0xff] %vm873, %v846
        %885 = vst.msk [vmem:[#allocation2 + $0x58] sm:$0xff] %vm873, %v848
        %886 = vst.msk [vmem:[#allocation2 + $0x60] sm:$0xff] %vm873, %v850
        %887 = vst.msk [vmem:[#allocation2 + $0x68] sm:$0xff] %vm873, %v852
        %888 = vst.msk [vmem:[#allocation2 + $0x70] sm:$0xff] %vm873, %v854
        %889 = vst.msk [vmem:[#allocation2 + $0x78] sm:$0xff] %vm873, %v856
        %vm906 = vcmask 1042432
        %vm907 = vcmask 1046532
        %vm908 = vmor %vm906, %vm907
        %v909 = vrot.slane %v223, 5
        %v910 = vrot.slane %v909, 4
        %v911 = vrot.slane %v224, 5
        %v912 = vsel %vm908, %v910, %v911
        %v913 = vrot.slane %v911, 4
        %v914 = vrot.slane %v225, 5
        %v915 = vsel %vm908, %v913, %v914
        %v916 = vrot.slane %v226, 5
        %v917 = vrot.slane %v916, 4
        %v918 = vrot.slane %v227, 5
        %v919 = vsel %vm908, %v917, %v918
        %v920 = vrot.slane %v918, 4
        %v921 = vrot.slane %v228, 5
        %v922 = vsel %vm908, %v920, %v921
        %v923 = vrot.slane %v229, 5
        %v924 = vrot.slane %v923, 4
        %v925 = vrot.slane %v230, 5
        %v926 = vsel %vm908, %v924, %v925
        %v927 = vrot.slane %v925, 4
        %v928 = vrot.slane %v231, 5
        %v929 = vsel %vm908, %v927, %v928
        %v930 = vrot.slane %v232, 5
        %v931 = vrot.slane %v930, 4
        %v932 = vrot.slane %v233, 5
        %v933 = vsel %vm908, %v931, %v932
        %v934 = vrot.slane %v932, 4
        %v935 = vrot.slane %v234, 5
        %v936 = vsel %vm908, %v934, %v935
        %v937 = vrot.slane %v235, 5
        %v938 = vrot.slane %v937, 4
        %v939 = vrot.slane %v236, 5
        %v940 = vsel %vm908, %v938, %v939
        %v941 = vrot.slane %v939, 4
        %v942 = vrot.slane %v237, 5
        %v943 = vsel %vm908, %v941, %v942
        %v944 = vrot.slane %v238, 5
        %v945 = vrot.slane %v944, 4
        %v946 = vrot.slane %v239, 5
        %v947 = vsel %vm908, %v945, %v946
        %v948 = vrot.slane %v946, 4
        %v949 = vrot.slane %v240, 5
        %v950 = vsel %vm908, %v948, %v949
        %v951 = vrot.slane %v241, 5
        %v952 = vrot.slane %v951, 4
        %v953 = vrot.slane %v242, 5
        %v954 = vsel %vm908, %v952, %v953
        %v955 = vrot.slane %v953, 4
        %v956 = vrot.slane %v243, 5
        %v957 = vsel %vm908, %v955, %v956
        %v958 = vrot.slane %v244, 5
        %v959 = vrot.slane %v958, 4
        %v960 = vrot.slane %v245, 5
        %v961 = vsel %vm908, %v959, %v960
        %v962 = vrot.slane %v960, 4
        %v963 = vrot.slane %v246, 5
        %v964 = vsel %vm908, %v962, %v963
        %v965 = vrot.slane %v247, 5
        %v966 = vrot.slane %v965, 4
        %v967 = vrot.slane %v248, 5
        %v968 = vsel %vm908, %v966, %v967
        %v969 = vrot.slane %v967, 4
        %v970 = vrot.slane %v249, 5
        %v971 = vsel %vm908, %v969, %v970
        %v972 = vrot.slane %v250, 5
        %v973 = vrot.slane %v972, 4
        %v974 = vrot.slane %v251, 5
        %v975 = vsel %vm908, %v973, %v974
        %v976 = vrot.slane %v974, 4
        %v977 = vrot.slane %v252, 5
        %v978 = vsel %vm908, %v976, %v977
        %v979 = vrot.slane %v253, 5
        %v980 = vrot.slane %v979, 4
        %v981 = vrot.slane %v254, 5
        %v982 = vsel %vm908, %v980, %v981
        %v983 = vrot.slane %v981, 4
        %v984 = vrot.slane %v255, 5
        %v985 = vsel %vm908, %v983, %v984
        %v986 = vrot.slane %v256, 5
        %v987 = vrot.slane %v986, 4
        %v988 = vrot.slane %v257, 5
        %v989 = vsel %vm908, %v987, %v988
        %v990 = vrot.slane %v988, 4
        %v991 = vrot.slane %v258, 5
        %v992 = vsel %vm908, %v990, %v991
        %v993 = vrot.slane %v259, 5
        %v994 = vrot.slane %v993, 4
        %v995 = vrot.slane %v260, 5
        %v996 = vsel %vm908, %v994, %v995
        %v997 = vrot.slane %v995, 4
        %v998 = vrot.slane %v261, 5
        %v999 = vsel %vm908, %v997, %v998
        %v1000 = vrot.slane %v262, 5
        %v1001 = vrot.slane %v1000, 4
        %v1002 = vrot.slane %v263, 5
        %v1003 = vsel %vm908, %v1001, %v1002
        %v1004 = vrot.slane %v1002, 4
        %v1005 = vrot.slane %v264, 5
        %v1006 = vsel %vm908, %v1004, %v1005
        %v1007 = vrot.slane %v265, 5
        %v1008 = vrot.slane %v1007, 4
        %v1009 = vrot.slane %v266, 5
        %v1010 = vsel %vm908, %v1008, %v1009
        %v1011 = vrot.slane %v1009, 4
        %v1012 = vrot.slane %v267, 5
        %v1013 = vsel %vm908, %v1011, %v1012
        %v1014 = vrot.slane %v268, 5
        %v1015 = vrot.slane %v1014, 4
        %v1016 = vrot.slane %v269, 5
        %v1017 = vsel %vm908, %v1015, %v1016
        %v1018 = vrot.slane %v1016, 4
        %v1019 = vrot.slane %v270, 5
        %v1020 = vsel %vm908, %v1018, %v1019
        %v1021 = vunpack.c.l.b16 %v912
        %v1022 = vunpack.c.l.b16 %v915
        %v1023 = vunpack.c.l.b16 %v919
        %v1024 = vunpack.c.l.b16 %v922
        %v1025 = vunpack.c.l.b16 %v926
        %v1026 = vunpack.c.l.b16 %v929
        %v1027 = vunpack.c.l.b16 %v933
        %v1028 = vunpack.c.l.b16 %v936
        %v1029 = vunpack.c.l.b16 %v940
        %v1030 = vunpack.c.l.b16 %v943
        %v1031 = vunpack.c.l.b16 %v947
        %v1032 = vunpack.c.l.b16 %v950
        %v1033 = vunpack.c.l.b16 %v954
        %v1034 = vunpack.c.l.b16 %v957
        %v1035 = vunpack.c.l.b16 %v961
        %v1036 = vunpack.c.l.b16 %v964
        %v1037 = vunpack.c.l.b16 %v968
        %v1038 = vunpack.c.l.b16 %v971
        %v1039 = vunpack.c.l.b16 %v975
        %v1040 = vunpack.c.l.b16 %v978
        %v1041 = vunpack.c.l.b16 %v982
        %v1042 = vunpack.c.l.b16 %v985
        %v1043 = vunpack.c.l.b16 %v989
        %v1044 = vunpack.c.l.b16 %v992
        %v1045 = vunpack.c.l.b16 %v996
        %v1046 = vunpack.c.l.b16 %v999
        %v1047 = vunpack.c.l.b16 %v1003
        %v1048 = vunpack.c.l.b16 %v1006
        %v1049 = vunpack.c.l.b16 %v1010
        %v1050 = vunpack.c.l.b16 %v1013
        %v1051 = vunpack.c.l.b16 %v1017
        %v1052 = vunpack.c.l.b16 %v1020
        %v1053 = vpack.c.b16 %v1022, %v1021
        %v1054 = vpack.c.b16 %v1024, %v1023
        %v1055 = vpack.c.b16 %v1026, %v1025
        %v1056 = vpack.c.b16 %v1028, %v1027
        %v1057 = vpack.c.b16 %v1030, %v1029
        %v1058 = vpack.c.b16 %v1032, %v1031
        %v1059 = vpack.c.b16 %v1034, %v1033
        %v1060 = vpack.c.b16 %v1036, %v1035
        %v1061 = vpack.c.b16 %v1038, %v1037
        %v1062 = vpack.c.b16 %v1040, %v1039
        %v1063 = vpack.c.b16 %v1042, %v1041
        %v1064 = vpack.c.b16 %v1044, %v1043
        %v1065 = vpack.c.b16 %v1046, %v1045
        %v1066 = vpack.c.b16 %v1048, %v1047
        %v1067 = vpack.c.b16 %v1050, %v1049
        %v1068 = vpack.c.b16 %v1052, %v1051
        %1069 = vrot.lane.b32.xlu0 %v1053, 8
        %v1070 = vpop.permute.xlu0 %1069
        %1071 = vrot.lane.b32.xlu0 %v1054, 8
        %v1072 = vpop.permute.xlu0 %1071
        %1073 = vrot.lane.b32.xlu0 %v1055, 8
        %v1074 = vpop.permute.xlu0 %1073
        %1075 = vrot.lane.b32.xlu0 %v1056, 8
        %v1076 = vpop.permute.xlu0 %1075
        %1077 = vrot.lane.b32.xlu0 %v1057, 8
        %v1078 = vpop.permute.xlu0 %1077
        %1079 = vrot.lane.b32.xlu0 %v1058, 8
        %v1080 = vpop.permute.xlu0 %1079
        %1081 = vrot.lane.b32.xlu0 %v1059, 8
        %v1082 = vpop.permute.xlu0 %1081
        %1083 = vrot.lane.b32.xlu0 %v1060, 8
        %v1084 = vpop.permute.xlu0 %1083
        %1085 = vrot.lane.b32.xlu0 %v1061, 8
        %v1086 = vpop.permute.xlu0 %1085
        %1087 = vrot.lane.b32.xlu0 %v1062, 8
        %v1088 = vpop.permute.xlu0 %1087
        %1089 = vrot.lane.b32.xlu0 %v1063, 8
        %v1090 = vpop.permute.xlu0 %1089
        %1091 = vrot.lane.b32.xlu0 %v1064, 8
        %v1092 = vpop.permute.xlu0 %1091
        %1093 = vrot.lane.b32.xlu0 %v1065, 8
        %v1094 = vpop.permute.xlu0 %1093
        %1095 = vrot.lane.b32.xlu0 %v1066, 8
        %v1096 = vpop.permute.xlu0 %1095
        %1097 = vrot.lane.b32.xlu0 %v1067, 8
        %v1098 = vpop.permute.xlu0 %1097
        %1099 = vrot.lane.b32.xlu0 %v1068, 8
        %v1100 = vpop.permute.xlu0 %1099
        %vm1117 = vcmask 97344
        %1118 = vst.msk [vmem:[#allocation2] sm:$0xff] %vm1117, %v1070
        %1119 = vst.msk [vmem:[#allocation2 + $0x8] sm:$0xff] %vm1117, %v1072
        %1120 = vst.msk [vmem:[#allocation2 + $0x10] sm:$0xff] %vm1117, %v1074
        %1121 = vst.msk [vmem:[#allocation2 + $0x18] sm:$0xff] %vm1117, %v1076
        %1122 = vst.msk [vmem:[#allocation2 + $0x20] sm:$0xff] %vm1117, %v1078
        %1123 = vst.msk [vmem:[#allocation2 + $0x28] sm:$0xff] %vm1117, %v1080
        %1124 = vst.msk [vmem:[#allocation2 + $0x30] sm:$0xff] %vm1117, %v1082
        %1125 = vst.msk [vmem:[#allocation2 + $0x38] sm:$0xff] %vm1117, %v1084
        %1126 = vst.msk [vmem:[#allocation2 + $0x40] sm:$0xff] %vm1117, %v1086
        %1127 = vst.msk [vmem:[#allocation2 + $0x48] sm:$0xff] %vm1117, %v1088
        %1128 = vst.msk [vmem:[#allocation2 + $0x50] sm:$0xff] %vm1117, %v1090
        %1129 = vst.msk [vmem:[#allocation2 + $0x58] sm:$0xff] %vm1117, %v1092
        %1130 = vst.msk [vmem:[#allocation2 + $0x60] sm:$0xff] %vm1117, %v1094
        %1131 = vst.msk [vmem:[#allocation2 + $0x68] sm:$0xff] %vm1117, %v1096
        %1132 = vst.msk [vmem:[#allocation2 + $0x70] sm:$0xff] %vm1117, %v1098
        %1133 = vst.msk [vmem:[#allocation2 + $0x78] sm:$0xff] %vm1117, %v1100
        %v1136 = vunpack.c.l.b16 %v271
        %v1137 = vunpack.c.l.b16 %v272
        %v1138 = vpack.c.b16 %v1137, %v1136
        %1139 = vrot.lane.b32.xlu0 %v342, 12
        %v1140 = vpop.permute.xlu0 %1139
        %1141 = vrot.lane.b32.xlu0 %v343, 12
        %v1142 = vpop.permute.xlu0 %1141
        %1143 = vrot.lane.b32.xlu0 %v344, 12
        %v1144 = vpop.permute.xlu0 %1143
        %1145 = vrot.lane.b32.xlu0 %v345, 12
        %v1146 = vpop.permute.xlu0 %1145
        %1147 = vrot.lane.b32.xlu0 %v346, 12
        %v1148 = vpop.permute.xlu0 %1147
        %1149 = vrot.lane.b32.xlu0 %v347, 12
        %v1150 = vpop.permute.xlu0 %1149
        %1151 = vrot.lane.b32.xlu0 %v348, 12
        %v1152 = vpop.permute.xlu0 %1151
        %1153 = vrot.lane.b32.xlu0 %v349, 12
        %v1154 = vpop.permute.xlu0 %1153
        %1155 = vrot.lane.b32.xlu0 %v350, 12
        %v1156 = vpop.permute.xlu0 %1155
        %1157 = vrot.lane.b32.xlu0 %v351, 12
        %v1158 = vpop.permute.xlu0 %1157
        %1159 = vrot.lane.b32.xlu0 %v352, 12
        %v1160 = vpop.permute.xlu0 %1159
        %1161 = vrot.lane.b32.xlu0 %v353, 12
        %v1162 = vpop.permute.xlu0 %1161
        %1163 = vrot.lane.b32.xlu0 %v354, 12
        %v1164 = vpop.permute.xlu0 %1163
        %1165 = vrot.lane.b32.xlu0 %v355, 12
        %v1166 = vpop.permute.xlu0 %1165
        %1167 = vrot.lane.b32.xlu0 %v356, 12
        %v1168 = vpop.permute.xlu0 %1167
        %1169 = vrot.lane.b32.xlu0 %v1138, 12
        %v1170 = vpop.permute.xlu0 %1169
        %vm1187 = vcmask 130144
        %1188 = vst.msk [vmem:[#allocation2] sm:$0xff] %vm1187, %v1140
        %1189 = vst.msk [vmem:[#allocation2 + $0x8] sm:$0xff] %vm1187, %v1142
        %1190 = vst.msk [vmem:[#allocation2 + $0x10] sm:$0xff] %vm1187, %v1144
        %1191 = vst.msk [vmem:[#allocation2 + $0x18] sm:$0xff] %vm1187, %v1146
        %1192 = vst.msk [vmem:[#allocation2 + $0x20] sm:$0xff] %vm1187, %v1148
        %1193 = vst.msk [vmem:[#allocation2 + $0x28] sm:$0xff] %vm1187, %v1150
        %1194 = vst.msk [vmem:[#allocation2 + $0x30] sm:$0xff] %vm1187, %v1152
        %1195 = vst.msk [vmem:[#allocation2 + $0x38] sm:$0xff] %vm1187, %v1154
        %1196 = vst.msk [vmem:[#allocation2 + $0x40] sm:$0xff] %vm1187, %v1156
        %1197 = vst.msk [vmem:[#allocation2 + $0x48] sm:$0xff] %vm1187, %v1158
        %1198 = vst.msk [vmem:[#allocation2 + $0x50] sm:$0xff] %vm1187, %v1160
        %1199 = vst.msk [vmem:[#allocation2 + $0x58] sm:$0xff] %vm1187, %v1162
        %1200 = vst.msk [vmem:[#allocation2 + $0x60] sm:$0xff] %vm1187, %v1164
        %1201 = vst.msk [vmem:[#allocation2 + $0x68] sm:$0xff] %vm1187, %v1166
        %1202 = vst.msk [vmem:[#allocation2 + $0x70] sm:$0xff] %vm1187, %v1168
        %1203 = vst.msk [vmem:[#allocation2 + $0x78] sm:$0xff] %vm1187, %v1170
        %v1205 = vshrl.u32 %v271, 16
        %v1207 = vrot.slane %v1205, 4
        %v1208 = vshll.u32 %v271, 16
        %v1210 = vrot.slane %v1208, 5
        %v1211 = vor.u32 %v1207, %v1210
        %v1212 = vrot.slane %v1211, 4
        %v1214 = vshll.u32 %v272, 16
        %v1216 = vrot.slane %v1214, 5
        %v1217 = vsel %vm392, %v1212, %v1216
        %v1218 = vshrl.u32 %v272, 16
        %v1220 = vrot.slane %v1218, 4
        %v1221 = vor.u32 %v1220, %v1216
        %v1222 = vrot.slane %v1221, 4
        %v1224 = vshll.u32 %v273, 16
        %v1226 = vrot.slane %v1224, 5
        %v1227 = vsel %vm392, %v1222, %v1226
        %v1228 = vunpack.c.l.b16 %v1217
        %v1229 = vunpack.c.l.b16 %v1227
        %v1230 = vpack.c.b16 %v1229, %v1228
        %1231 = vrot.lane.b32.xlu0 %v810, 16
        %v1232 = vpop.permute.xlu0 %1231
        %1233 = vrot.lane.b32.xlu0 %v811, 16
        %v1234 = vpop.permute.xlu0 %1233
        %1235 = vrot.lane.b32.xlu0 %v812, 16
        %v1236 = vpop.permute.xlu0 %1235
        %1237 = vrot.lane.b32.xlu0 %v813, 16
        %v1238 = vpop.permute.xlu0 %1237
        %1239 = vrot.lane.b32.xlu0 %v814, 16
        %v1240 = vpop.permute.xlu0 %1239
        %1241 = vrot.lane.b32.xlu0 %v815, 16
        %v1242 = vpop.permute.xlu0 %1241
        %1243 = vrot.lane.b32.xlu0 %v816, 16
        %v1244 = vpop.permute.xlu0 %1243
        %1245 = vrot.lane.b32.xlu0 %v817, 16
        %v1246 = vpop.permute.xlu0 %1245
        %1247 = vrot.lane.b32.xlu0 %v818, 16
        %v1248 = vpop.permute.xlu0 %1247
        %1249 = vrot.lane.b32.xlu0 %v819, 16
        %v1250 = vpop.permute.xlu0 %1249
        %1251 = vrot.lane.b32.xlu0 %v820, 16
        %v1252 = vpop.permute.xlu0 %1251
        %1253 = vrot.lane.b32.xlu0 %v821, 16
        %v1254 = vpop.permute.xlu0 %1253
        %1255 = vrot.lane.b32.xlu0 %v822, 16
        %v1256 = vpop.permute.xlu0 %1255
        %1257 = vrot.lane.b32.xlu0 %v823, 16
        %v1258 = vpop.permute.xlu0 %1257
        %1259 = vrot.lane.b32.xlu0 %v824, 16
        %v1260 = vpop.permute.xlu0 %1259
        %1261 = vrot.lane.b32.xlu0 %v1230, 16
        %v1262 = vpop.permute.xlu0 %1261
        %vm1279 = vcmask 162944
        %1280 = vst.msk [vmem:[#allocation2] sm:$0xff] %vm1279, %v1232
        %1281 = vst.msk [vmem:[#allocation2 + $0x8] sm:$0xff] %vm1279, %v1234
        %1282 = vst.msk [vmem:[#allocation2 + $0x10] sm:$0xff] %vm1279, %v1236
        %1283 = vst.msk [vmem:[#allocation2 + $0x18] sm:$0xff] %vm1279, %v1238
        %1284 = vst.msk [vmem:[#allocation2 + $0x20] sm:$0xff] %vm1279, %v1240
        %1285 = vst.msk [vmem:[#allocation2 + $0x28] sm:$0xff] %vm1279, %v1242
        %1286 = vst.msk [vmem:[#allocation2 + $0x30] sm:$0xff] %vm1279, %v1244
        %1287 = vst.msk [vmem:[#allocation2 + $0x38] sm:$0xff] %vm1279, %v1246
        %1288 = vst.msk [vmem:[#allocation2 + $0x40] sm:$0xff] %vm1279, %v1248
        %1289 = vst.msk [vmem:[#allocation2 + $0x48] sm:$0xff] %vm1279, %v1250
        %1290 = vst.msk [vmem:[#allocation2 + $0x50] sm:$0xff] %vm1279, %v1252
        %1291 = vst.msk [vmem:[#allocation2 + $0x58] sm:$0xff] %vm1279, %v1254
        %1292 = vst.msk [vmem:[#allocation2 + $0x60] sm:$0xff] %vm1279, %v1256
        %1293 = vst.msk [vmem:[#allocation2 + $0x68] sm:$0xff] %vm1279, %v1258
        %1294 = vst.msk [vmem:[#allocation2 + $0x70] sm:$0xff] %vm1279, %v1260
        %1295 = vst.msk [vmem:[#allocation2 + $0x78] sm:$0xff] %vm1279, %v1262
        %v1297 = vrot.slane %v271, 5
        %v1298 = vrot.slane %v1297, 4
        %v1299 = vrot.slane %v272, 5
        %v1300 = vsel %vm908, %v1298, %v1299
        %v1301 = vrot.slane %v1299, 4
        %v1302 = vrot.slane %v273, 5
        %v1303 = vsel %vm908, %v1301, %v1302
        %v1304 = vunpack.c.l.b16 %v1300
        %v1305 = vunpack.c.l.b16 %v1303
        %v1306 = vpack.c.b16 %v1305, %v1304
        %1307 = vrot.lane.b32.xlu0 %v1054, 20
        %v1308 = vpop.permute.xlu0 %1307
        %1309 = vrot.lane.b32.xlu0 %v1055, 20
        %v1310 = vpop.permute.xlu0 %1309
        %1311 = vrot.lane.b32.xlu0 %v1056, 20
        %v1312 = vpop.permute.xlu0 %1311
        %1313 = vrot.lane.b32.xlu0 %v1057, 20
        %v1314 = vpop.permute.xlu0 %1313
        %1315 = vrot.lane.b32.xlu0 %v1058, 20
        %v1316 = vpop.permute.xlu0 %1315
        %1317 = vrot.lane.b32.xlu0 %v1059, 20
        %v1318 = vpop.permute.xlu0 %1317
        %1319 = vrot.lane.b32.xlu0 %v1060, 20
        %v1320 = vpop.permute.xlu0 %1319
        %1321 = vrot.lane.b32.xlu0 %v1061, 20
        %v1322 = vpop.permute.xlu0 %1321
        %1323 = vrot.lane.b32.xlu0 %v1062, 20
        %v1324 = vpop.permute.xlu0 %1323
        %1325 = vrot.lane.b32.xlu0 %v1063, 20
        %v1326 = vpop.permute.xlu0 %1325
        %1327 = vrot.lane.b32.xlu0 %v1064, 20
        %v1328 = vpop.permute.xlu0 %1327
        %1329 = vrot.lane.b32.xlu0 %v1065, 20
        %v1330 = vpop.permute.xlu0 %1329
        %1331 = vrot.lane.b32.xlu0 %v1066, 20
        %v1332 = vpop.permute.xlu0 %1331
        %1333 = vrot.lane.b32.xlu0 %v1067, 20
        %v1334 = vpop.permute.xlu0 %1333
        %1335 = vrot.lane.b32.xlu0 %v1068, 20
        %v1336 = vpop.permute.xlu0 %1335
        %1337 = vrot.lane.b32.xlu0 %v1306, 20
        %v1338 = vpop.permute.xlu0 %1337
        %vm1355 = vcmask 195744
        %1356 = vst.msk [vmem:[#allocation2] sm:$0xff] %vm1355, %v1308
        %1357 = vst.msk [vmem:[#allocation2 + $0x8] sm:$0xff] %vm1355, %v1310
        %1358 = vst.msk [vmem:[#allocation2 + $0x10] sm:$0xff] %vm1355, %v1312
        %1359 = vst.msk [vmem:[#allocation2 + $0x18] sm:$0xff] %vm1355, %v1314
        %1360 = vst.msk [vmem:[#allocation2 + $0x20] sm:$0xff] %vm1355, %v1316
        %1361 = vst.msk [vmem:[#allocation2 + $0x28] sm:$0xff] %vm1355, %v1318
        %1362 = vst.msk [vmem:[#allocation2 + $0x30] sm:$0xff] %vm1355, %v1320
        %1363 = vst.msk [vmem:[#allocation2 + $0x38] sm:$0xff] %vm1355, %v1322
        %1364 = vst.msk [vmem:[#allocation2 + $0x40] sm:$0xff] %vm1355, %v1324
        %1365 = vst.msk [vmem:[#allocation2 + $0x48] sm:$0xff] %vm1355, %v1326
        %1366 = vst.msk [vmem:[#allocation2 + $0x50] sm:$0xff] %vm1355, %v1328
        %1367 = vst.msk [vmem:[#allocation2 + $0x58] sm:$0xff] %vm1355, %v1330
        %1368 = vst.msk [vmem:[#allocation2 + $0x60] sm:$0xff] %vm1355, %v1332
        %1369 = vst.msk [vmem:[#allocation2 + $0x68] sm:$0xff] %vm1355, %v1334
        %1370 = vst.msk [vmem:[#allocation2 + $0x70] sm:$0xff] %vm1355, %v1336
        %1371 = vst.msk [vmem:[#allocation2 + $0x78] sm:$0xff] %vm1355, %v1338
        %v1374 = vunpack.c.l.b16 %v274
        %v1375 = vunpack.c.l.b16 %v275
        %v1376 = vpack.c.b16 %v1375, %v1374
        %1377 = vrot.lane.b32.xlu0 %v343, 24
        %v1378 = vpop.permute.xlu0 %1377
        %1379 = vrot.lane.b32.xlu0 %v344, 24
        %v1380 = vpop.permute.xlu0 %1379
        %1381 = vrot.lane.b32.xlu0 %v345, 24
        %v1382 = vpop.permute.xlu0 %1381
        %1383 = vrot.lane.b32.xlu0 %v346, 24
        %v1384 = vpop.permute.xlu0 %1383
        %1385 = vrot.lane.b32.xlu0 %v347, 24
        %v1386 = vpop.permute.xlu0 %1385
        %1387 = vrot.lane.b32.xlu0 %v348, 24
        %v1388 = vpop.permute.xlu0 %1387
        %1389 = vrot.lane.b32.xlu0 %v349, 24
        %v1390 = vpop.permute.xlu0 %1389
        %1391 = vrot.lane.b32.xlu0 %v350, 24
        %v1392 = vpop.permute.xlu0 %1391
        %1393 = vrot.lane.b32.xlu0 %v351, 24
        %v1394 = vpop.permute.xlu0 %1393
        %1395 = vrot.lane.b32.xlu0 %v352, 24
        %v1396 = vpop.permute.xlu0 %1395
        %1397 = vrot.lane.b32.xlu0 %v353, 24
        %v1398 = vpop.permute.xlu0 %1397
        %1399 = vrot.lane.b32.xlu0 %v354, 24
        %v1400 = vpop.permute.xlu0 %1399
        %1401 = vrot.lane.b32.xlu0 %v355, 24
        %v1402 = vpop.permute.xlu0 %1401
        %1403 = vrot.lane.b32.xlu0 %v356, 24
        %v1404 = vpop.permute.xlu0 %1403
        %1405 = vrot.lane.b32.xlu0 %v1138, 24
        %v1406 = vpop.permute.xlu0 %1405
        %1407 = vrot.lane.b32.xlu0 %v1376, 24
        %v1408 = vpop.permute.xlu0 %1407
        %vm1425 = vcmask 228544
        %1426 = vst.msk [vmem:[#allocation2] sm:$0xff] %vm1425, %v1378
        %1427 = vst.msk [vmem:[#allocation2 + $0x8] sm:$0xff] %vm1425, %v1380
        %1428 = vst.msk [vmem:[#allocation2 + $0x10] sm:$0xff] %vm1425, %v1382
        %1429 = vst.msk [vmem:[#allocation2 + $0x18] sm:$0xff] %vm1425, %v1384
        %1430 = vst.msk [vmem:[#allocation2 + $0x20] sm:$0xff] %vm1425, %v1386
        %1431 = vst.msk [vmem:[#allocation2 + $0x28] sm:$0xff] %vm1425, %v1388
        %1432 = vst.msk [vmem:[#allocation2 + $0x30] sm:$0xff] %vm1425, %v1390
        %1433 = vst.msk [vmem:[#allocation2 + $0x38] sm:$0xff] %vm1425, %v1392
        %1434 = vst.msk [vmem:[#allocation2 + $0x40] sm:$0xff] %vm1425, %v1394
        %1435 = vst.msk [vmem:[#allocation2 + $0x48] sm:$0xff] %vm1425, %v1396
        %1436 = vst.msk [vmem:[#allocation2 + $0x50] sm:$0xff] %vm1425, %v1398
        %1437 = vst.msk [vmem:[#allocation2 + $0x58] sm:$0xff] %vm1425, %v1400
        %1438 = vst.msk [vmem:[#allocation2 + $0x60] sm:$0xff] %vm1425, %v1402
        %1439 = vst.msk [vmem:[#allocation2 + $0x68] sm:$0xff] %vm1425, %v1404
        %1440 = vst.msk [vmem:[#allocation2 + $0x70] sm:$0xff] %vm1425, %v1406
        %1441 = vst.msk [vmem:[#allocation2 + $0x78] sm:$0xff] %vm1425, %v1408
        %v1443 = vshrl.u32 %v274, 16
        %v1445 = vrot.slane %v1443, 4
        %v1446 = vshll.u32 %v274, 16
        %v1448 = vrot.slane %v1446, 5
        %v1449 = vor.u32 %v1445, %v1448
        %v1450 = vrot.slane %v1449, 4
        %v1452 = vshll.u32 %v275, 16
        %v1454 = vrot.slane %v1452, 5
        %v1455 = vsel %vm392, %v1450, %v1454
        %v1456 = vshrl.u32 %v275, 16
        %v1458 = vrot.slane %v1456, 4
        %v1459 = vor.u32 %v1458, %v1454
        %v1460 = vrot.slane %v1459, 4
        %v1462 = vshll.u32 %v276, 16
        %v1464 = vrot.slane %v1462, 5
        %v1465 = vsel %vm392, %v1460, %v1464
        %v1466 = vunpack.c.l.b16 %v1455
        %v1467 = vunpack.c.l.b16 %v1465
        %v1468 = vpack.c.b16 %v1467, %v1466
        %1469 = vrot.lane.b32.xlu0 %v811, 28
        %v1470 = vpop.permute.xlu0 %1469
        %1471 = vrot.lane.b32.xlu0 %v812, 28
        %v1472 = vpop.permute.xlu0 %1471
        %1473 = vrot.lane.b32.xlu0 %v813, 28
        %v1474 = vpop.permute.xlu0 %1473
        %1475 = vrot.lane.b32.xlu0 %v814, 28
        %v1476 = vpop.permute.xlu0 %1475
        %1477 = vrot.lane.b32.xlu0 %v815, 28
        %v1478 = vpop.permute.xlu0 %1477
        %1479 = vrot.lane.b32.xlu0 %v816, 28
        %v1480 = vpop.permute.xlu0 %1479
        %1481 = vrot.lane.b32.xlu0 %v817, 28
        %v1482 = vpop.permute.xlu0 %1481
        %1483 = vrot.lane.b32.xlu0 %v818, 28
        %v1484 = vpop.permute.xlu0 %1483
        %1485 = vrot.lane.b32.xlu0 %v819, 28
        %v1486 = vpop.permute.xlu0 %1485
        %1487 = vrot.lane.b32.xlu0 %v820, 28
        %v1488 = vpop.permute.xlu0 %1487
        %1489 = vrot.lane.b32.xlu0 %v821, 28
        %v1490 = vpop.permute.xlu0 %1489
        %1491 = vrot.lane.b32.xlu0 %v822, 28
        %v1492 = vpop.permute.xlu0 %1491
        %1493 = vrot.lane.b32.xlu0 %v823, 28
        %v1494 = vpop.permute.xlu0 %1493
        %1495 = vrot.lane.b32.xlu0 %v824, 28
        %v1496 = vpop.permute.xlu0 %1495
        %1497 = vrot.lane.b32.xlu0 %v1230, 28
        %v1498 = vpop.permute.xlu0 %1497
        %1499 = vrot.lane.b32.xlu0 %v1468, 28
        %v1500 = vpop.permute.xlu0 %1499
        %vm1517 = vcmask 261344
        %1518 = vst.msk [vmem:[#allocation2] sm:$0xff] %vm1517, %v1470
        %1519 = vst.msk [vmem:[#allocation2 + $0x8] sm:$0xff] %vm1517, %v1472
        %1520 = vst.msk [vmem:[#allocation2 + $0x10] sm:$0xff] %vm1517, %v1474
        %1521 = vst.msk [vmem:[#allocation2 + $0x18] sm:$0xff] %vm1517, %v1476
        %1522 = vst.msk [vmem:[#allocation2 + $0x20] sm:$0xff] %vm1517, %v1478
        %1523 = vst.msk [vmem:[#allocation2 + $0x28] sm:$0xff] %vm1517, %v1480
        %1524 = vst.msk [vmem:[#allocation2 + $0x30] sm:$0xff] %vm1517, %v1482
        %1525 = vst.msk [vmem:[#allocation2 + $0x38] sm:$0xff] %vm1517, %v1484
        %1526 = vst.msk [vmem:[#allocation2 + $0x40] sm:$0xff] %vm1517, %v1486
        %1527 = vst.msk [vmem:[#allocation2 + $0x48] sm:$0xff] %vm1517, %v1488
        %1528 = vst.msk [vmem:[#allocation2 + $0x50] sm:$0xff] %vm1517, %v1490
        %1529 = vst.msk [vmem:[#allocation2 + $0x58] sm:$0xff] %vm1517, %v1492
        %1530 = vst.msk [vmem:[#allocation2 + $0x60] sm:$0xff] %vm1517, %v1494
        %1531 = vst.msk [vmem:[#allocation2 + $0x68] sm:$0xff] %vm1517, %v1496
        %1532 = vst.msk [vmem:[#allocation2 + $0x70] sm:$0xff] %vm1517, %v1498
        %1533 = vst.msk [vmem:[#allocation2 + $0x78] sm:$0xff] %vm1517, %v1500
        %v1535 = vrot.slane %v274, 5
        %v1536 = vrot.slane %v1535, 4
        %v1537 = vrot.slane %v275, 5
        %v1538 = vsel %vm908, %v1536, %v1537
        %v1539 = vrot.slane %v1537, 4
        %v1540 = vrot.slane %v276, 5
        %v1541 = vsel %vm908, %v1539, %v1540
        %v1542 = vunpack.c.l.b16 %v1538
        %v1543 = vunpack.c.l.b16 %v1541
        %v1544 = vpack.c.b16 %v1543, %v1542
        %1545 = vrot.lane.b32.xlu0 %v1055, 32
        %v1546 = vpop.permute.xlu0 %1545
        %1547 = vrot.lane.b32.xlu0 %v1056, 32
        %v1548 = vpop.permute.xlu0 %1547
        %1549 = vrot.lane.b32.xlu0 %v1057, 32
        %v1550 = vpop.permute.xlu0 %1549
        %1551 = vrot.lane.b32.xlu0 %v1058, 32
        %v1552 = vpop.permute.xlu0 %1551
        %1553 = vrot.lane.b32.xlu0 %v1059, 32
        %v1554 = vpop.permute.xlu0 %1553
        %1555 = vrot.lane.b32.xlu0 %v1060, 32
        %v1556 = vpop.permute.xlu0 %1555
        %1557 = vrot.lane.b32.xlu0 %v1061, 32
        %v1558 = vpop.permute.xlu0 %1557
        %1559 = vrot.lane.b32.xlu0 %v1062, 32
        %v1560 = vpop.permute.xlu0 %1559
        %1561 = vrot.lane.b32.xlu0 %v1063, 32
        %v1562 = vpop.permute.xlu0 %1561
        %1563 = vrot.lane.b32.xlu0 %v1064, 32
        %v1564 = vpop.permute.xlu0 %1563
        %1565 = vrot.lane.b32.xlu0 %v1065, 32
        %v1566 = vpop.permute.xlu0 %1565
        %1567 = vrot.lane.b32.xlu0 %v1066, 32
        %v1568 = vpop.permute.xlu0 %1567
        %1569 = vrot.lane.b32.xlu0 %v1067, 32
        %v1570 = vpop.permute.xlu0 %1569
        %1571 = vrot.lane.b32.xlu0 %v1068, 32
        %v1572 = vpop.permute.xlu0 %1571
        %1573 = vrot.lane.b32.xlu0 %v1306, 32
        %v1574 = vpop.permute.xlu0 %1573
        %1575 = vrot.lane.b32.xlu0 %v1544, 32
        %v1576 = vpop.permute.xlu0 %1575
        %vm1593 = vcmask 294144
        %1594 = vst.msk [vmem:[#allocation2] sm:$0xff] %vm1593, %v1546
        %1595 = vst.msk [vmem:[#allocation2 + $0x8] sm:$0xff] %vm1593, %v1548
        %1596 = vst.msk [vmem:[#allocation2 + $0x10] sm:$0xff] %vm1593, %v1550
        %1597 = vst.msk [vmem:[#allocation2 + $0x18] sm:$0xff] %vm1593, %v1552
        %1598 = vst.msk [vmem:[#allocation2 + $0x20] sm:$0xff] %vm1593, %v1554
        %1599 = vst.msk [vmem:[#allocation2 + $0x28] sm:$0xff] %vm1593, %v1556
        %1600 = vst.msk [vmem:[#allocation2 + $0x30] sm:$0xff] %vm1593, %v1558
        %1601 = vst.msk [vmem:[#allocation2 + $0x38] sm:$0xff] %vm1593, %v1560
        %1602 = vst.msk [vmem:[#allocation2 + $0x40] sm:$0xff] %vm1593, %v1562
        %1603 = vst.msk [vmem:[#allocation2 + $0x48] sm:$0xff] %vm1593, %v1564
        %1604 = vst.msk [vmem:[#allocation2 + $0x50] sm:$0xff] %vm1593, %v1566
        %1605 = vst.msk [vmem:[#allocation2 + $0x58] sm:$0xff] %vm1593, %v1568
        %1606 = vst.msk [vmem:[#allocation2 + $0x60] sm:$0xff] %vm1593, %v1570
        %1607 = vst.msk [vmem:[#allocation2 + $0x68] sm:$0xff] %vm1593, %v1572
        %1608 = vst.msk [vmem:[#allocation2 + $0x70] sm:$0xff] %vm1593, %v1574
        %1609 = vst.msk [vmem:[#allocation2 + $0x78] sm:$0xff] %vm1593, %v1576
        %v1610 = vld [vmem:[#allocation2] sm:$0xff]
        %v1611 = vld [vmem:[#allocation2 + $0x8] sm:$0xff]
        %v1612 = vld [vmem:[#allocation2 + $0x10] sm:$0xff]
        %v1613 = vld [vmem:[#allocation2 + $0x18] sm:$0xff]
        %v1614 = vld [vmem:[#allocation2 + $0x20] sm:$0xff]
        %v1615 = vld [vmem:[#allocation2 + $0x28] sm:$0xff]
        %v1616 = vld [vmem:[#allocation2 + $0x30] sm:$0xff]
        %v1617 = vld [vmem:[#allocation2 + $0x38] sm:$0xff]
        %v1618 = vld [vmem:[#allocation2 + $0x40] sm:$0xff]
        %v1619 = vld [vmem:[#allocation2 + $0x48] sm:$0xff]
        %v1620 = vld [vmem:[#allocation2 + $0x50] sm:$0xff]
        %v1621 = vld [vmem:[#allocation2 + $0x58] sm:$0xff]
        %v1622 = vld [vmem:[#allocation2 + $0x60] sm:$0xff]
        %v1623 = vld [vmem:[#allocation2 + $0x68] sm:$0xff]
        %v1624 = vld [vmem:[#allocation2 + $0x70] sm:$0xff]
        %v1625 = vld [vmem:[#allocation2 + $0x78] sm:$0xff]
        %v1626 = vld [vmem:[%s1] sm:$0xf]
        %v1627 = vld [vmem:[%s1 + $0x4] sm:$0xf]
        %v1628 = vld [vmem:[%s1 + $0x8] sm:$0xf]
        %v1629 = vld [vmem:[%s1 + $0xc] sm:$0xf]
        %v1630 = vld [vmem:[%s1 + $0x10] sm:$0x3]
        %v1631 = vld [vmem:[%s2] sm:$0x1]
        %v1633 = vlaneseq
        %v1634 = vshrl.u32 %v1633, 7
        %v1635 = vsub.s32 0, %v1634
        %v1636 = vrot.slane %v1631, %v1635
        %v1643 = vunpack.c.l.b16 %v1626
        %v1644 = vunpack.c.l.b16 %v1627
        %v1645 = vunpack.c.l.b16 %v1628
        %v1646 = vunpack.c.l.b16 %v1629
        %v1647 = vunpack.c.l.b16 %v1630
        %v1648 = vpack.c.b16 %v1644, %v1643
        %v1649 = vpack.c.b16 %v1646, %v1645
        %v1650 = vpack.c.b16 %v1647, %v1647
        %vm1653 = vcmask 293888
        %v1655 = vsel %vm1653, %v1610, 0
        %v1658 = vsel %vm1653, %v1611, 0
        %v1661 = vsel %vm1653, %v1612, 0
        %v1664 = vsel %vm1653, %v1613, 0
        %v1667 = vsel %vm1653, %v1614, 0
        %v1670 = vsel %vm1653, %v1615, 0
        %v1673 = vsel %vm1653, %v1616, 0
        %v1676 = vsel %vm1653, %v1617, 0
        %v1679 = vsel %vm1653, %v1618, 0
        %v1682 = vsel %vm1653, %v1619, 0
        %v1685 = vsel %vm1653, %v1620, 0
        %v1688 = vsel %vm1653, %v1621, 0
        %v1691 = vsel %vm1653, %v1622, 0
        %v1694 = vsel %vm1653, %v1623, 0
        %v1697 = vsel %vm1653, %v1624, 0
        %v1700 = vsel %vm1653, %v1625, 0
        %vm1702 = vcmask 1041408
        %v1704 = vsel %vm1702, %v1650, 0
        %1706 = vmatprep.subr.bf16.mxu0 0
        %1707 = vmatpush1.bf16.msra.mxu0 %v1648
        %1708 = vmatprep.subr.bf16.mxu0 0
        %1709 = vmatpush1.bf16.msra.mxu0 %v1649
        %1710 = vmatprep.subr.bf16.mxu0 0
        %1711 = vmatpush1.bf16.msra.mxu0 %v1704
        %1712 = vmatprep.subr.bf16.mxu0 0
        %1713 = vmatpush1.bf16.msra.mxu0 0
        %1714 = vmatprep.subr.bf16.mxu0 0
        %1715 = vmatpush1.bf16.msra.mxu0 0
        %1716 = vmatprep.subr.bf16.mxu0 0
        %1717 = vmatpush1.bf16.msra.mxu0 0
        %1718 = vmatprep.subr.bf16.mxu0 0
        %1719 = vmatpush1.bf16.msra.mxu0 0
        %1720 = vmatprep.subr.bf16.mxu0 0
        %1721 = vmatpush1.bf16.msra.mxu0 0
        %1722 = vmatprep.subr.bf16.mxu0 0
        %1723 = vmatpush1.bf16.msra.mxu0 0
        %1724 = vmatprep.subr.bf16.mxu0 0
        %1725 = vmatpush1.bf16.msra.mxu0 0
        %1726 = vmatprep.subr.bf16.mxu0 0
        %1727 = vmatpush1.bf16.msra.mxu0 0
        %1728 = vmatprep.subr.bf16.mxu0 0
        %1729 = vmatpush1.bf16.msra.mxu0 0
        %1730 = vmatprep.subr.bf16.mxu0 0
        %1731 = vmatpush1.bf16.msra.mxu0 0
        %1732 = vmatprep.subr.bf16.mxu0 0
        %1733 = vmatpush1.bf16.msra.mxu0 0
        %1734 = vmatprep.subr.bf16.mxu0 0
        %1735 = vmatpush1.bf16.msra.mxu0 0
        %1736 = vmatprep.subr.bf16.mxu0 0
        %1737 = vmatpush1.bf16.msra.mxu0 0
        %1738 = vmatprep.mubr.bf16.mxu0 0
        %1739 = vmatmul.mubr.bf16.gmra.mrb[0].mxu0 %v1655
        %v1740 = vpop.f32.mrb[0].mxu0
        %v1741 = vadd.f32 %v1636, %v1740
        %v1742 = vpop.f32.mrb[0].mxu0
        %v1743 = vpop.f32.mrb[0].mxu0
        %v1744 = vadd.f32 %v1636, %v1743
        %v1745 = vpop.f32.mrb[0].mxu0
        %1746 = vmatprep.mubr.bf16.mxu0 0
        %1747 = vmatmul.mubr.bf16.gmra.mrb[0].mxu0 %v1658
        %v1748 = vpop.f32.mrb[0].mxu0
        %v1749 = vadd.f32 %v1636, %v1748
        %v1750 = vpop.f32.mrb[0].mxu0
        %v1751 = vpop.f32.mrb[0].mxu0
        %v1752 = vadd.f32 %v1636, %v1751
        %v1753 = vpop.f32.mrb[0].mxu0
        %1754 = vmatprep.mubr.bf16.mxu0 0
        %1755 = vmatmul.mubr.bf16.gmra.mrb[0].mxu0 %v1661
        %v1756 = vpop.f32.mrb[0].mxu0
        %v1757 = vadd.f32 %v1636, %v1756
        %v1758 = vpop.f32.mrb[0].mxu0
        %v1759 = vpop.f32.mrb[0].mxu0
        %v1760 = vadd.f32 %v1636, %v1759
        %v1761 = vpop.f32.mrb[0].mxu0
        %1762 = vmatprep.mubr.bf16.mxu0 0
        %1763 = vmatmul.mubr.bf16.gmra.mrb[0].mxu0 %v1664
        %v1764 = vpop.f32.mrb[0].mxu0
        %v1765 = vadd.f32 %v1636, %v1764
        %v1766 = vpop.f32.mrb[0].mxu0
        %v1767 = vpop.f32.mrb[0].mxu0
        %v1768 = vadd.f32 %v1636, %v1767
        %v1769 = vpop.f32.mrb[0].mxu0
        %1770 = vmatprep.mubr.bf16.mxu0 0
        %1771 = vmatmul.mubr.bf16.gmra.mrb[0].mxu0 %v1667
        %v1772 = vpop.f32.mrb[0].mxu0
        %v1773 = vadd.f32 %v1636, %v1772
        %v1774 = vpop.f32.mrb[0].mxu0
        %v1775 = vpop.f32.mrb[0].mxu0
        %v1776 = vadd.f32 %v1636, %v1775
        %v1777 = vpop.f32.mrb[0].mxu0
        %1778 = vmatprep.mubr.bf16.mxu0 0
        %1779 = vmatmul.mubr.bf16.gmra.mrb[0].mxu0 %v1670
        %v1780 = vpop.f32.mrb[0].mxu0
        %v1781 = vadd.f32 %v1636, %v1780
        %v1782 = vpop.f32.mrb[0].mxu0
        %v1783 = vpop.f32.mrb[0].mxu0
        %v1784 = vadd.f32 %v1636, %v1783
        %v1785 = vpop.f32.mrb[0].mxu0
        %1786 = vmatprep.mubr.bf16.mxu0 0
        %1787 = vmatmul.mubr.bf16.gmra.mrb[0].mxu0 %v1673
        %v1788 = vpop.f32.mrb[0].mxu0
        %v1789 = vadd.f32 %v1636, %v1788
        %v1790 = vpop.f32.mrb[0].mxu0
        %v1791 = vpop.f32.mrb[0].mxu0
        %v1792 = vadd.f32 %v1636, %v1791
        %v1793 = vpop.f32.mrb[0].mxu0
        %1794 = vmatprep.mubr.bf16.mxu0 0
        %1795 = vmatmul.mubr.bf16.gmra.mrb[0].mxu0 %v1676
        %v1796 = vpop.f32.mrb[0].mxu0
        %v1797 = vadd.f32 %v1636, %v1796
        %v1798 = vpop.f32.mrb[0].mxu0
        %v1799 = vpop.f32.mrb[0].mxu0
        %v1800 = vadd.f32 %v1636, %v1799
        %v1801 = vpop.f32.mrb[0].mxu0
        %1802 = vmatprep.mubr.bf16.mxu0 0
        %1803 = vmatmul.mubr.bf16.gmra.mrb[0].mxu0 %v1679
        %v1804 = vpop.f32.mrb[0].mxu0
        %v1805 = vadd.f32 %v1636, %v1804
        %v1806 = vpop.f32.mrb[0].mxu0
        %v1807 = vpop.f32.mrb[0].mxu0
        %v1808 = vadd.f32 %v1636, %v1807
        %v1809 = vpop.f32.mrb[0].mxu0
        %1810 = vmatprep.mubr.bf16.mxu0 0
        %1811 = vmatmul.mubr.bf16.gmra.mrb[0].mxu0 %v1682
        %v1812 = vpop.f32.mrb[0].mxu0
        %v1813 = vadd.f32 %v1636, %v1812
        %v1814 = vpop.f32.mrb[0].mxu0
        %v1815 = vpop.f32.mrb[0].mxu0
        %v1816 = vadd.f32 %v1636, %v1815
        %v1817 = vpop.f32.mrb[0].mxu0
        %1818 = vmatprep.mubr.bf16.mxu0 0
        %1819 = vmatmul.mubr.bf16.gmra.mrb[0].mxu0 %v1685
        %v1820 = vpop.f32.mrb[0].mxu0
        %v1821 = vadd.f32 %v1636, %v1820
        %v1822 = vpop.f32.mrb[0].mxu0
        %v1823 = vpop.f32.mrb[0].mxu0
        %v1824 = vadd.f32 %v1636, %v1823
        %v1825 = vpop.f32.mrb[0].mxu0
        %1826 = vmatprep.mubr.bf16.mxu0 0
        %1827 = vmatmul.mubr.bf16.gmra.mrb[0].mxu0 %v1688
        %v1828 = vpop.f32.mrb[0].mxu0
        %v1829 = vadd.f32 %v1636, %v1828
        %v1830 = vpop.f32.mrb[0].mxu0
        %v1831 = vpop.f32.mrb[0].mxu0
        %v1832 = vadd.f32 %v1636, %v1831
        %v1833 = vpop.f32.mrb[0].mxu0
        %1834 = vmatprep.mubr.bf16.mxu0 0
        %1835 = vmatmul.mubr.bf16.gmra.mrb[0].mxu0 %v1691
        %v1836 = vpop.f32.mrb[0].mxu0
        %v1837 = vadd.f32 %v1636, %v1836
        %v1838 = vpop.f32.mrb[0].mxu0
        %v1839 = vpop.f32.mrb[0].mxu0
        %v1840 = vadd.f32 %v1636, %v1839
        %v1841 = vpop.f32.mrb[0].mxu0
        %1842 = vmatprep.mubr.bf16.mxu0 0
        %1843 = vmatmul.mubr.bf16.gmra.mrb[0].mxu0 %v1694
        %v1844 = vpop.f32.mrb[0].mxu0
        %v1845 = vadd.f32 %v1636, %v1844
        %v1846 = vpop.f32.mrb[0].mxu0
        %v1847 = vpop.f32.mrb[0].mxu0
        %v1848 = vadd.f32 %v1636, %v1847
        %v1849 = vpop.f32.mrb[0].mxu0
        %1850 = vmatprep.mubr.bf16.mxu0 0
        %1851 = vmatmul.mubr.bf16.gmra.mrb[0].mxu0 %v1697
        %v1852 = vpop.f32.mrb[0].mxu0
        %v1853 = vadd.f32 %v1636, %v1852
        %v1854 = vpop.f32.mrb[0].mxu0
        %v1855 = vpop.f32.mrb[0].mxu0
        %v1856 = vadd.f32 %v1636, %v1855
        %v1857 = vpop.f32.mrb[0].mxu0
        %1858 = vmatprep.mubr.bf16.mxu0 0
        %1859 = vmatmul.mubr.bf16.gmra.mrb[0].mxu0 %v1700
        %v1860 = vpop.f32.mrb[0].mxu0
        %v1861 = vadd.f32 %v1636, %v1860
        %v1862 = vpop.f32.mrb[0].mxu0
        %v1863 = vpop.f32.mrb[0].mxu0
        %v1864 = vadd.f32 %v1636, %v1863
        %v1865 = vpop.f32.mrb[0].mxu0
        %1866 = vdwg.mxu0
        %v1867 = vmax.f32 %v1741, 0.0
        %v1868 = vmax.f32 %v1744, 0.0
        %v1869 = vmax.f32 %v1749, 0.0
        %v1870 = vmax.f32 %v1752, 0.0
        %v1871 = vmax.f32 %v1757, 0.0
        %v1872 = vmax.f32 %v1760, 0.0
        %v1873 = vmax.f32 %v1765, 0.0
        %v1874 = vmax.f32 %v1768, 0.0
        %v1875 = vmax.f32 %v1773, 0.0
        %v1876 = vmax.f32 %v1776, 0.0
        %v1877 = vmax.f32 %v1781, 0.0
        %v1878 = vmax.f32 %v1784, 0.0
        %v1879 = vmax.f32 %v1789, 0.0
        %v1880 = vmax.f32 %v1792, 0.0
        %v1881 = vmax.f32 %v1797, 0.0
        %v1882 = vmax.f32 %v1800, 0.0
        %v1883 = vmax.f32 %v1805, 0.0
        %v1884 = vmax.f32 %v1808, 0.0
        %v1885 = vmax.f32 %v1813, 0.0
        %v1886 = vmax.f32 %v1816, 0.0
        %v1887 = vmax.f32 %v1821, 0.0
        %v1888 = vmax.f32 %v1824, 0.0
        %v1889 = vmax.f32 %v1829, 0.0
        %v1890 = vmax.f32 %v1832, 0.0
        %v1891 = vmax.f32 %v1837, 0.0
        %v1892 = vmax.f32 %v1840, 0.0
        %v1893 = vmax.f32 %v1845, 0.0
        %v1894 = vmax.f32 %v1848, 0.0
        %v1895 = vmax.f32 %v1853, 0.0
        %v1896 = vmax.f32 %v1856, 0.0
        %v1897 = vmax.f32 %v1861, 0.0
        %v1898 = vmax.f32 %v1864, 0.0
        %vm1899 = vcmask 261120
        %v1900 = vsel %vm1899, %v1867, 0.0
        %v1901 = vsel %vm1899, %v1868, 0.0
        %v1902 = vadd.f32 %v1900, %v1901
        %v1903 = vsel %vm1899, %v1869, 0.0
        %v1904 = vadd.f32 %v1902, %v1903
        %v1905 = vsel %vm1899, %v1870, 0.0
        %v1906 = vadd.f32 %v1904, %v1905
        %v1907 = vsel %vm1899, %v1871, 0.0
        %v1908 = vadd.f32 %v1906, %v1907
        %v1909 = vsel %vm1899, %v1872, 0.0
        %v1910 = vadd.f32 %v1908, %v1909
        %v1911 = vsel %vm1899, %v1873, 0.0
        %v1912 = vadd.f32 %v1910, %v1911
        %v1913 = vsel %vm1899, %v1874, 0.0
        %v1914 = vadd.f32 %v1912, %v1913
        %v1915 = vsel %vm1899, %v1875, 0.0
        %v1916 = vadd.f32 %v1914, %v1915
        %v1917 = vsel %vm1899, %v1876, 0.0
        %v1918 = vadd.f32 %v1916, %v1917
        %v1919 = vsel %vm1899, %v1877, 0.0
        %v1920 = vadd.f32 %v1918, %v1919
        %v1921 = vsel %vm1899, %v1878, 0.0
        %v1922 = vadd.f32 %v1920, %v1921
        %v1923 = vsel %vm1899, %v1879, 0.0
        %v1924 = vadd.f32 %v1922, %v1923
        %v1925 = vsel %vm1899, %v1880, 0.0
        %v1926 = vadd.f32 %v1924, %v1925
        %v1927 = vsel %vm1899, %v1881, 0.0
        %v1928 = vadd.f32 %v1926, %v1927
        %v1929 = vsel %vm1899, %v1882, 0.0
        %v1930 = vadd.f32 %v1928, %v1929
        %v1931 = vsel %vm1899, %v1883, 0.0
        %v1932 = vadd.f32 %v1930, %v1931
        %v1933 = vsel %vm1899, %v1884, 0.0
        %v1934 = vadd.f32 %v1932, %v1933
        %v1935 = vsel %vm1899, %v1885, 0.0
        %v1936 = vadd.f32 %v1934, %v1935
        %v1937 = vsel %vm1899, %v1886, 0.0
        %v1938 = vadd.f32 %v1936, %v1937
        %v1939 = vsel %vm1899, %v1887, 0.0
        %v1940 = vadd.f32 %v1938, %v1939
        %v1941 = vsel %vm1899, %v1888, 0.0
        %v1942 = vadd.f32 %v1940, %v1941
        %v1943 = vsel %vm1899, %v1889, 0.0
        %v1944 = vadd.f32 %v1942, %v1943
        %v1945 = vsel %vm1899, %v1890, 0.0
        %v1946 = vadd.f32 %v1944, %v1945
        %v1947 = vsel %vm1899, %v1891, 0.0
        %v1948 = vadd.f32 %v1946, %v1947
        %v1949 = vsel %vm1899, %v1892, 0.0
        %v1950 = vadd.f32 %v1948, %v1949
        %v1951 = vsel %vm1899, %v1893, 0.0
        %v1952 = vadd.f32 %v1950, %v1951
        %v1953 = vsel %vm1899, %v1894, 0.0
        %v1954 = vadd.f32 %v1952, %v1953
        %v1955 = vsel %vm1899, %v1895, 0.0
        %v1956 = vadd.f32 %v1954, %v1955
        %v1957 = vsel %vm1899, %v1896, 0.0
        %v1958 = vadd.f32 %v1956, %v1957
        %v1959 = vsel %vm1899, %v1897, 0.0
        %v1960 = vadd.f32 %v1958, %v1959
        %v1961 = vsel %vm1899, %v1898, 0.0
        %v1962 = vadd.f32 %v1960, %v1961
        %v1963 = vrot.slane %v1962, 4
        %v1964 = vadd.f32 %v1962, %v1963
        %v1965 = vrot.slane %v1964, 2
        %v1966 = vadd.f32 %v1964, %v1965
        %v1967 = vrot.slane %v1966, 1
        %v1968 = vadd.f32 %v1966, %v1967
        %v1969 = vmul.f32 %v1968, 0.00390625
        %v1970 = vld [vmem:[%s3] sm:$0xff]
        %v1971 = vld [vmem:[%s3 + $0x8] sm:$0xff]
        %v1972 = vld [vmem:[%s3 + $0x10] sm:$0xff]
        %v1973 = vld [vmem:[%s3 + $0x18] sm:$0xff]
        %v1974 = vld [vmem:[%s4] sm:$0x1]
        %v1976 = vsel %vm1899, %v1969, 0
        %1978 = vmatprep.subr.mxu0 0.0
        %1979 = vmatpush1.msra.mxu0 %v1970
        %1980 = vmatprep.subr.mxu0 0.0
        %1981 = vmatpush1.msra.mxu0 %v1971
        %1982 = vmatprep.subr.mxu0 0.0
        %1983 = vmatpush1.msra.mxu0 %v1972
        %1984 = vmatprep.subr.mxu0 0.0
        %1985 = vmatpush1.msra.mxu0 %v1973
        %1986 = vmatprep.subr.mxu0 0.0
        %1987 = vmatpush1.msra.mxu0 0.0
        %1988 = vmatprep.subr.mxu0 0.0
        %1989 = vmatpush1.msra.mxu0 0.0
        %1990 = vmatprep.subr.mxu0 0.0
        %1991 = vmatpush1.msra.mxu0 0.0
        %1992 = vmatprep.subr.mxu0 0.0
        %1993 = vmatpush1.msra.mxu0 0.0
        %1994 = vmatprep.subr.mxu0 0.0
        %1995 = vmatpush1.msra.mxu0 0.0
        %1996 = vmatprep.subr.mxu0 0.0
        %1997 = vmatpush1.msra.mxu0 0.0
        %1998 = vmatprep.subr.mxu0 0.0
        %1999 = vmatpush1.msra.mxu0 0.0
        %2000 = vmatprep.subr.mxu0 0.0
        %2001 = vmatpush1.msra.mxu0 0.0
        %2002 = vmatprep.subr.mxu0 0.0
        %2003 = vmatpush1.msra.mxu0 0.0
        %2004 = vmatprep.subr.mxu0 0.0
        %2005 = vmatpush1.msra.mxu0 0.0
        %2006 = vmatprep.subr.mxu0 0.0
        %2007 = vmatpush1.msra.mxu0 0.0
        %2008 = vmatprep.subr.mxu0 0.0
        %2009 = vmatpush1.msra.mxu0 0.0
        %2010 = vmatprep.subr.mxu0 0.0
        %2011 = vmatpush1.msra.mxu0 0.0
        %2012 = vmatprep.subr.mxu0 0.0
        %2013 = vmatpush1.msra.mxu0 0.0
        %2014 = vmatprep.subr.mxu0 0.0
        %2015 = vmatpush1.msra.mxu0 0.0
        %2016 = vmatprep.subr.mxu0 0.0
        %2017 = vmatpush1.msra.mxu0 0.0
        %2018 = vmatprep.subr.mxu0 0.0
        %2019 = vmatpush1.msra.mxu0 0.0
        %2020 = vmatprep.subr.mxu0 0.0
        %2021 = vmatpush1.msra.mxu0 0.0
        %2022 = vmatprep.subr.mxu0 0.0
        %2023 = vmatpush1.msra.mxu0 0.0
        %2024 = vmatprep.subr.mxu0 0.0
        %2025 = vmatpush1.msra.mxu0 0.0
        %2026 = vmatprep.subr.mxu0 0.0
        %2027 = vmatpush1.msra.mxu0 0.0
        %2028 = vmatprep.subr.mxu0 0.0
        %2029 = vmatpush1.msra.mxu0 0.0
        %2030 = vmatprep.subr.mxu0 0.0
        %2031 = vmatpush1.msra.mxu0 0.0
        %2032 = vmatprep.subr.mxu0 0.0
        %2033 = vmatpush1.msra.mxu0 0.0
        %2034 = vmatprep.subr.mxu0 0.0
        %2035 = vmatpush1.msra.mxu0 0.0
        %2036 = vmatprep.subr.mxu0 0.0
        %2037 = vmatpush1.msra.mxu0 0.0
        %2038 = vmatprep.subr.mxu0 0.0
        %2039 = vmatpush1.msra.mxu0 0.0
        %2040 = vmatprep.subr.mxu0 0.0
        %2041 = vmatpush1.msra.mxu0 0.0
        %2042 = vmatprep.mubr.f32.mxu0 0.0
        %2043 = vmatmul.mubr.f32.gmra.mrb[0].mxu0 %v1976
        %v2044 = vpop.f32.mrb[0].mxu0
        %v2045 = vadd.f32 %v1974, %v2044
        %v2046 = vpop.f32.mrb[0].mxu0
        %2047 = vdwg.mxu0
        %2048 = vst [vmem:[%s216] sm:$0x1] %v2045
        %s2049 = sand.u32 %s137, 1
        %s2050 = scalar_lea.sflag [#allocation4], %s2049
        %s2051 = sand.u32 %s137, 1
        %s2052 = scalar_lea.vmem [#allocation3], %s2051
        // Predicated region
        $region41: #{tpu_custom_call.1} parent=39 // pred_check
          %p2053 = pneg %p147
        $region42: #{tpu_custom_call.1} parent=39 // pred_check_branch
          %2055 = sbr.rel (%p2053) target = $region44
        $region43: #{tpu_custom_call.1} parent=39 // pred_region
          %s2057 = ssub.s32 16, 16
          %2058 = vsyncadd %s2050, %s2057
          %s2059 = smul.addr %s19, 16
          %s2060 = scalar_lea.hbm %s5, %s2059
          %s2062 = sshll.u32 %s2052, 4
          %s2063 = int_to_ptr.vmem [resolvable:$true] %s2062
          %2065 = dma.vmem_to_hbm [thread:$0]  %s2063, 16, %s2060, %s2050
        $region44: #{tpu_custom_call.1} parent=39 // pred_fallthru
          _
      $region40: #{tpu_custom_call.1} parent=5 // pred_fallthru
        _
      %p2066 = scmp.le.s32.totalorder 2, %s14
      // Predicated region
      $region45: #{tpu_custom_call.1} parent=5 // pred_check
        %p2067 = pneg %p2066
      $region46: #{tpu_custom_call.1} parent=5 // pred_check_branch
        %2069 = sbr.rel (%p2067) target = $region48
      $region47: #{tpu_custom_call.1} parent=5 // pred_region
        %s2070 = ssub.s32 %s14, 2
        // Predicated region
        $region49: #{tpu_custom_call.1} parent=47 // pred_check
          %p2071 = pneg %p153
        $region50: #{tpu_custom_call.1} parent=47 // pred_check_branch
          %2073 = sbr.rel (%p2071) target = $region52
        $region51: #{tpu_custom_call.1} parent=47 // pred_region
          %s2074 = sand.u32 %s138, 1
          %s2075 = scalar_lea.sflag [#allocation4], %s2074
          %s2076 = sand.u32 %s138, 1
          %s2077 = scalar_lea.vmem [#allocation3], %s2076
          %2078 = dma.done %s2075, 16
        $region52: #{tpu_custom_call.1} parent=47 // pred_fallthru
          _
      $region48: #{tpu_custom_call.1} parent=5 // pred_fallthru
        _
    $region6: #{tpu_custom_call.1} parent=1 // loop_footer
      %s18 = sadd.s32 1, %s14
    $region7: #{tpu_custom_call.1} parent=1 // loop_footer_branch
      %13 = sbr.rel target = $region3
    $region8: #{tpu_custom_call.1} parent=1 // loop_exit
      _
    %2079 = vsyncpa [#allocation4], 1
    %s2080 = scalar_lea.sflag [#allocation4], 1
    %2081 = vsyncpa %s2080, 1

</llo_original>
